<compile_context>
chip_gen: v5e
topology: v5e:2x2
jax: 0.10.0
libtpu: 0.0.40
codegen_flags: <defaults>
</compile_context>

<pallas_src>
import math
import functools

import jax
import jax.numpy as jnp
from jax.experimental import pallas as pl
from jax.experimental.pallas import tpu as pltpu


# ----------------------------- in-kernel helpers -----------------------------

def _layer_norm(x, gamma, beta, eps=1e-5):
    # LayerNorm over the last dim, unbiased=False variance (matches torch.var(unbiased=False)).
    mean = jnp.mean(x, axis=-1, keepdims=True)
    var = jnp.mean(jnp.square(x - mean), axis=-1, keepdims=True)
    return (x - mean) * jax.lax.rsqrt(var + eps) * gamma + beta


def _gelu_exact(x):
    # nn.GELU() default = exact erf-based GELU (erf runs on the EUP).
    inv_sqrt2 = jnp.float32(1.0 / math.sqrt(2.0))
    return 0.5 * x * (1.0 + jax.lax.erf(x * inv_sqrt2))


# --------------------------------- kernel ------------------------------------

def _block_kernel(num_heads,
                  x_ref, mask_ref, wqkv_ref, bqkv_ref, wo_ref, bo_ref,
                  g1_ref, bln1_ref, w1_ref, b1_ref, w2_ref, b2_ref,
                  g2_ref, bln2_ref, out_ref):
    S, E = x_ref.shape
    H = num_heads
    hs = E // H
    mm_dtype = wqkv_ref.dtype            # matmul input dtype (f32 or bf16)

    x_f32 = x_ref[...].astype(jnp.float32)      # residual / LN path stays f32
    x_mm = x_ref[...].astype(mm_dtype)

    # --- QKV projection: (S, E) @ (E, 3E) + (1, 3E) -> (S, 3E), f32 accumulation ---
    # Wqkv columns were pre-permuted to [Q | K | V] blocks (head-major) and the attention
    # scale was folded into the Q block, so slicing below is 128-lane aligned.
    qkv = jnp.dot(x_mm, wqkv_ref[...], preferred_element_type=jnp.float32) + bqkv_ref[...]

    q = qkv[:, :E].reshape(S, H, hs)             # already scaled by 1/sqrt(hs)
    k = qkv[:, E:2 * E].reshape(S, H, hs)
    v = qkv[:, 2 * E:].reshape(S, H, hs)

    # --- batched per-head attention scores: (H, S, S), no explicit transpose of K ---
    scores = jnp.einsum('qhd,khd->hqk', q.astype(mm_dtype), k.astype(mm_dtype),
                        preferred_element_type=jnp.float32)

    # padding mask over key positions (1 = keep, 0 = pad), matches masked_fill(-inf)
    mask = mask_ref[...]                          # (1, S) int32
    scores = jnp.where(mask[None, :, :] == 0, -jnp.inf, scores)

    # --- stable softmax; divide replaced by EUP approximate reciprocal ---
    m = jnp.max(scores, axis=-1, keepdims=True)
    p = jnp.exp(scores - m)
    denom = jnp.sum(p, axis=-1, keepdims=True)
    weights = p * pl.reciprocal(denom, approx=True)

    # --- attended values: (H,S,S) x (S,H,hs) -> (S,H,hs), then merge heads -> (S,E) ---
    ctx = jnp.einsum('hqk,khd->qhd', weights.astype(mm_dtype), v.astype(mm_dtype),
                     preferred_element_type=jnp.float32)
    attended = ctx.reshape(S, E)

    # --- output projection ---
    attn_out = jnp.dot(attended.astype(mm_dtype), wo_ref[...],
                       preferred_element_type=jnp.float32) + bo_ref[...]

    # --- residual + LayerNorm 1 ---
    y = _layer_norm(x_f32 + attn_out, g1_ref[...], bln1_ref[...])

    # --- feed-forward: Linear -> GELU -> (Dropout=id) -> Linear -> (Dropout=id) ---
    h1 = jnp.dot(y.astype(mm_dtype), w1_ref[...],
                 preferred_element_type=jnp.float32) + b1_ref[...]
    h1 = _gelu_exact(h1)
    h2 = jnp.dot(h1.astype(mm_dtype), w2_ref[...],
                 preferred_element_type=jnp.float32) + b2_ref[...]

    # --- residual + LayerNorm 2 ---
    out = _layer_norm(h2 + y, g2_ref[...], bln2_ref[...])
    out_ref[...] = out.astype(out_ref.dtype)


# --------------------------------- wrapper ------------------------------------

def prepare_params(params, num_heads, use_bf16=False):
    """Permute Wqkv/bqkv from interleaved [Q_h|K_h|V_h] columns to contiguous [Q|K|V] blocks
    (head-major), fold 1/sqrt(head_size) into the Q columns/bias, optionally cast matmul
    weights to bf16 (biases / LN params stay f32).  In production, cache this result."""
    E = params["wo"].shape[0]
    hs = E // num_heads
    scale = 1.0 / math.sqrt(hs)

    wqkv = params["wqkv"].reshape(E, num_heads, 3, hs).transpose(0, 2, 1, 3).reshape(E, 3 * E)
    bqkv = params["bqkv"].reshape(1, num_heads, 3, hs).transpose(0, 2, 1, 3).reshape(1, 3 * E)
    col_scale = jnp.concatenate(
        [jnp.full((E,), scale, jnp.float32), jnp.ones((2 * E,), jnp.float32)])
    wqkv = wqkv * col_scale
    bqkv = bqkv * col_scale

    wdt = jnp.bfloat16 if use_bf16 else jnp.float32
    out = dict(params)
    out["wqkv"] = wqkv.astype(wdt)
    out["bqkv"] = bqkv.astype(jnp.float32)
    out["wo"] = params["wo"].astype(wdt)
    out["w1"] = params["w1"].astype(wdt)
    out["w2"] = params["w2"].astype(wdt)
    return out


def _vmem_limit_bytes(S, E, hidden, num_heads, weight_dtype):
    wb = jnp.dtype(weight_dtype).itemsize
    weight_bytes = (E * 3 * E + E * E + E * hidden + hidden * E) * wb
    bias_bytes = (3 * E + E + hidden + 5 * E) * 4
    block_bytes = 2 * S * E * 4                              # x block + out block
    inter_bytes = (S * 3 * E + 2 * num_heads * S * S + S * hidden + 6 * S * E) * 4
    est = 2 * (weight_bytes + bias_bytes + block_bytes) + inter_bytes + (8 << 20)
    return int(min(max(est, 32 << 20), 100 << 20))


def post_norm_attention_block(x, params, num_heads, mask=None, use_bf16=False):
    """x: (B, S, E) float32.  mask: optional (B, S) {0,1} padding mask.  Returns (B, S, E)."""
    B, S, E = x.shape
    hidden = params["w1"].shape[1]
    prepped = prepare_params(params, num_heads, use_bf16=use_bf16)

    if mask is None:
        mask = jnp.ones((B, S), jnp.int32)
    mask = mask.astype(jnp.int32).reshape(B, 1, S)

    full2d = lambda shape: pl.BlockSpec(shape, lambda b: (0, 0))
    kernel = functools.partial(_block_kernel, num_heads)
    vmem_limit = _vmem_limit_bytes(S, E, hidden, num_heads, prepped["wqkv"].dtype)

    return pl.pallas_call(
        kernel,
        out_shape=jax.ShapeDtypeStruct((B, S, E), x.dtype),
        grid_spec=pltpu.PrefetchScalarGridSpec(
            num_scalar_prefetch=0,
            grid=(B,),
            in_specs=[
                pl.BlockSpec((None, S, E), lambda b: (b, 0, 0)),   # x   (batch squeezed)
                pl.BlockSpec((None, 1, S), lambda b: (b, 0, 0)),   # mask
                full2d((E, 3 * E)),                                # Wqkv (permuted, scaled)
                full2d((1, 3 * E)),                                # bqkv
                full2d((E, E)),                                    # Wo
                full2d((1, E)),                                    # bo
                full2d((1, E)),                                    # ln1 gamma
                full2d((1, E)),                                    # ln1 beta
                full2d((E, hidden)),                               # W1
                full2d((1, hidden)),                               # b1
                full2d((hidden, E)),                               # W2
                full2d((1, E)),                                    # b2
                full2d((1, E)),                                    # ln2 gamma
                full2d((1, E)),                                    # ln2 beta
            ],
            out_specs=pl.BlockSpec((None, S, E), lambda b: (b, 0, 0)),
        ),
        compiler_params=pltpu.CompilerParams(
            dimension_semantics=("parallel",),
            vmem_limit_bytes=vmem_limit),
    )(x, mask,
      prepped["wqkv"], prepped["bqkv"], prepped["wo"], prepped["bo"],
      prepped["ln1_g"], prepped["ln1_b"],
      prepped["w1"], prepped["b1"], prepped["w2"], prepped["b2"],
      prepped["ln2_g"], prepped["ln2_b"])


# ------------------------- pure-JAX reference (module semantics) -------------------------

def _reference_forward(x, params, num_heads):
    B, S, E = x.shape
    hs = E // num_heads
    qkv = x @ params["wqkv"] + params["bqkv"]                              # (B,S,3E) interleaved
    qkv = qkv.reshape(B, S, num_heads, 3 * hs).transpose(0, 2, 1, 3)       # split_heads
    q, k, v = qkv[..., :hs], qkv[..., hs:2 * hs], qkv[..., 2 * hs:]
    scores = jnp.einsum('bhqd,bhkd->bhqk', q, k) / math.sqrt(hs)
    w = jax.nn.softmax(scores, axis=-1)
    ctx = jnp.einsum('bhqk,bhkd->bhqd', w, v)
    attended = ctx.transpose(0, 2, 1, 3).reshape(B, S, E)                  # merge_heads
    attn_out = attended @ params["wo"] + params["bo"]

    def ln(t, g, b):
        m = t.mean(-1, keepdims=True)
        var = ((t - m) ** 2).mean(-1, keepdims=True)
        return (t - m) / jnp.sqrt(var + 1e-5) * g + b

    y = ln(x + attn_out, params["ln1_g"], params["ln1_b"])
    h1 = y @ params["w1"] + params["b1"]
    h1 = 0.5 * h1 * (1.0 + jax.lax.erf(h1 / math.sqrt(2.0)))
    h2 = h1 @ params["w2"] + params["b2"]
    return ln(h2 + y, params["ln2_g"], params["ln2_b"])


# --------------------------------- init & demo ------------------------------------

def init_params(key, embed_dim, hidden_dim):
    """Deterministic synthetic parameters (shapes match the PyTorch module, (in,out) storage)."""
    ks = jax.random.split(key, 6)
    scale = 0.05
    return {
        "wqkv": scale * jax.random.normal(ks[0], (embed_dim, 3 * embed_dim), jnp.float32),
        "bqkv": scale * jax.random.normal(ks[1], (1, 3 * embed_dim), jnp.float32),
        "wo": scale * jax.random.normal(ks[2], (embed_dim, embed_dim), jnp.float32),
        "bo": jnp.zeros((1, embed_dim), jnp.float32),
        "ln1_g": jnp.ones((1, embed_dim), jnp.float32),
        "ln1_b": jnp.zeros((1, embed_dim), jnp.float32),
        "w1": scale * jax.random.normal(ks[3], (embed_dim, hidden_dim), jnp.float32),
        "b1": jnp.zeros((1, hidden_dim), jnp.float32),
        "w2": scale * jax.random.normal(ks[4], (hidden_dim, embed_dim), jnp.float32),
        "b2": jnp.zeros((1, embed_dim), jnp.float32),
        "ln2_g": jnp.ones((1, embed_dim), jnp.float32),
        "ln2_b": jnp.zeros((1, embed_dim), jnp.float32),
    }


if __name__ == "__main__":
    # Small, lane-dense shapes: batch=2, seq=8, embed=128 (multiple of 128), heads=4, hidden=256.
    B, S, E, NUM_HEADS, HIDDEN = 2, 8, 128, 4, 256

    key = jax.random.PRNGKey(0)
    k_x, k_p = jax.random.split(key)
    x = jax.random.normal(k_x, (B, S, E), jnp.float32)
    params = init_params(k_p, E, HIDDEN)

    # f32 path
    out = jax.block_until_ready(post_norm_attention_block(x, params, NUM_HEADS))
    assert out.shape == (B, S, E), out.shape
    assert jnp.all(jnp.isfinite(out)), "non-finite values in kernel output"

    # numerical check against a pure-JAX reference of the module
    ref = _reference_forward(x, params, NUM_HEADS)
    err = float(jnp.max(jnp.abs(out - ref)))
    assert err < 1e-2, f"f32 kernel mismatch vs reference: max abs err = {err}"

    # bf16 matmul path (f32 accumulation / statistics) — looser tolerance
    out_bf16 = jax.block_until_ready(
        post_norm_attention_block(x, params, NUM_HEADS, use_bf16=True))
    assert jnp.all(jnp.isfinite(out_bf16)), "non-finite values in bf16 kernel output"
    assert float(jnp.max(jnp.abs(out_bf16 - ref))) < 0.25, "bf16 kernel diverged from reference"

    print("KERNEL_OK")
</pallas_src>

<mosaic_0001>
module attributes {stable_mosaic.version = 11 : i64} {
  func.func @_block_kernel(%arg0: i32, %arg1: memref<1x8x128xf32, #tpu.memory_space<vmem>>, %arg2: memref<1x1x8xi32, #tpu.memory_space<vmem>>, %arg3: memref<128x384xf32, #tpu.memory_space<vmem>>, %arg4: memref<1x384xf32, #tpu.memory_space<vmem>>, %arg5: memref<128x128xf32, #tpu.memory_space<vmem>>, %arg6: memref<1x128xf32, #tpu.memory_space<vmem>>, %arg7: memref<1x128xf32, #tpu.memory_space<vmem>>, %arg8: memref<1x128xf32, #tpu.memory_space<vmem>>, %arg9: memref<128x256xf32, #tpu.memory_space<vmem>>, %arg10: memref<1x256xf32, #tpu.memory_space<vmem>>, %arg11: memref<256x128xf32, #tpu.memory_space<vmem>>, %arg12: memref<1x128xf32, #tpu.memory_space<vmem>>, %arg13: memref<1x128xf32, #tpu.memory_space<vmem>>, %arg14: memref<1x128xf32, #tpu.memory_space<vmem>>, %arg15: memref<1x8x128xf32, #tpu.memory_space<vmem>>) attributes {dimension_semantics = [#tpu.dimension_semantics<parallel>], iteration_bounds = array<i64: 2>, scalar_prefetch = 0 : i64, scratch_operands = 0 : i64, tpu.core_type = #tpu.core_type<tc>, window_params = [{transform_indices = @transform_0, window_bounds = array<i64: 1, 8, 128>}, {transform_indices = @transform_1, window_bounds = array<i64: 1, 1, 8>}, {pipeline_mode = #tpu.pipeline_mode<synchronous>, transform_indices = @transform_2, window_bounds = array<i64: 128, 384>}, {pipeline_mode = #tpu.pipeline_mode<synchronous>, transform_indices = @transform_3, window_bounds = array<i64: 1, 384>}, {pipeline_mode = #tpu.pipeline_mode<synchronous>, transform_indices = @transform_4, window_bounds = array<i64: 128, 128>}, {pipeline_mode = #tpu.pipeline_mode<synchronous>, transform_indices = @transform_5, window_bounds = array<i64: 1, 128>}, {pipeline_mode = #tpu.pipeline_mode<synchronous>, transform_indices = @transform_6, window_bounds = array<i64: 1, 128>}, {pipeline_mode = #tpu.pipeline_mode<synchronous>, transform_indices = @transform_7, window_bounds = array<i64: 1, 128>}, {pipeline_mode = #tpu.pipeline_mode<synchronous>, transform_indices = @transform_8, window_bounds = array<i64: 128, 256>}, {pipeline_mode = #tpu.pipeline_mode<synchronous>, transform_indices = @transform_9, window_bounds = array<i64: 1, 256>}, {pipeline_mode = #tpu.pipeline_mode<synchronous>, transform_indices = @transform_10, window_bounds = array<i64: 256, 128>}, {pipeline_mode = #tpu.pipeline_mode<synchronous>, transform_indices = @transform_11, window_bounds = array<i64: 1, 128>}, {pipeline_mode = #tpu.pipeline_mode<synchronous>, transform_indices = @transform_12, window_bounds = array<i64: 1, 128>}, {pipeline_mode = #tpu.pipeline_mode<synchronous>, transform_indices = @transform_13, window_bounds = array<i64: 1, 128>}, {transform_indices = @transform_14, window_bounds = array<i64: 1, 8, 128>}]} {
    %c0 = arith.constant 0 : index
    %c0_0 = arith.constant 0 : index
    %c0_1 = arith.constant 0 : index
    %0 = vector.load %arg1[%c0, %c0_0, %c0_1] : memref<1x8x128xf32, #tpu.memory_space<vmem>>, vector<1x8x128xf32>
    %1 = vector.shape_cast %0 : vector<1x8x128xf32> to vector<8x128xf32>
    %c0_2 = arith.constant 0 : index
    %c0_3 = arith.constant 0 : index
    %c0_4 = arith.constant 0 : index
    %2 = vector.load %arg1[%c0_2, %c0_3, %c0_4] : memref<1x8x128xf32, #tpu.memory_space<vmem>>, vector<1x8x128xf32>
    %3 = vector.shape_cast %2 : vector<1x8x128xf32> to vector<8x128xf32>
    %c0_5 = arith.constant 0 : index
    %c0_6 = arith.constant 0 : index
    %4 = vector.load %arg3[%c0_5, %c0_6] : memref<128x384xf32, #tpu.memory_space<vmem>>, vector<128x384xf32>
    %cst = arith.constant dense<0.000000e+00> : vector<8x384xf32>
    %5 = tpu.matmul %3, %4, %cst {dimension_numbers = #tpu.dot_dimension_numbers<[1], [0], [0], [1], [0, 0, 1, 1], [], []>} : vector<8x128xf32>, vector<128x384xf32>, vector<8x384xf32> -> vector<8x384xf32>
    %c0_7 = arith.constant 0 : index
    %c0_8 = arith.constant 0 : index
    %6 = vector.load %arg4[%c0_7, %c0_8] : memref<1x384xf32, #tpu.memory_space<vmem>>, vector<1x384xf32>
    %7 = vector.broadcast %6 : vector<1x384xf32> to vector<8x384xf32>
    %8 = arith.addf %5, %7 : vector<8x384xf32>
    %9 = vector.extract_strided_slice %8 {offsets = [0, 0], sizes = [8, 128], strides = [1, 1]} : vector<8x384xf32> to vector<8x128xf32>
    %10 = vector.shape_cast %9 : vector<8x128xf32> to vector<8x4x32xf32>
    %11 = vector.extract_strided_slice %8 {offsets = [0, 128], sizes = [8, 128], strides = [1, 1]} : vector<8x384xf32> to vector<8x128xf32>
    %12 = vector.shape_cast %11 : vector<8x128xf32> to vector<8x4x32xf32>
    %13 = vector.extract_strided_slice %8 {offsets = [0, 256], sizes = [8, 128], strides = [1, 1]} : vector<8x384xf32> to vector<8x128xf32>
    %14 = vector.shape_cast %13 : vector<8x128xf32> to vector<8x4x32xf32>
    "tpu.trace_start"() <{level = 10 : i32, message = "qhd,khd->hqk"}> : () -> ()
    %cst_9 = arith.constant dense<0.000000e+00> : vector<4x8x8xf32>
    %15 = tpu.matmul %10, %12, %cst_9 {dimension_numbers = #tpu.dot_dimension_numbers<[2], [2], [0], [0], [0, 1, 0, 0, 1, 0], [1], [1]>} : vector<8x4x32xf32>, vector<8x4x32xf32>, vector<4x8x8xf32> -> vector<4x8x8xf32>
    "tpu.trace_stop"() : () -> ()
    %c0_10 = arith.constant 0 : index
    %c0_11 = arith.constant 0 : index
    %c0_12 = arith.constant 0 : index
    %16 = vector.load %arg2[%c0_10, %c0_11, %c0_12] : memref<1x1x8xi32, #tpu.memory_space<vmem>>, vector<1x1x8xi32>
    %17 = vector.shape_cast %16 : vector<1x1x8xi32> to vector<1x8xi32>
    %18 = vector.shape_cast %17 : vector<1x8xi32> to vector<1x1x8xi32>
    %c0_i32 = arith.constant 0 : i32
    %19 = vector.broadcast %c0_i32 : i32 to vector<1x1x8xi32>
    %20 = arith.cmpi eq, %18, %19 : vector<1x1x8xi32>
    %cst_13 = arith.constant 0xFF800000 : f32
    %21 = vector.shape_cast %20 : vector<1x1x8xi1> to vector<1x1x8xi1>
    %22 = vector.broadcast %21 : vector<1x1x8xi1> to vector<4x8x8xi1>
    %23 = vector.broadcast %cst_13 : f32 to vector<4x8x8xf32>
    %24 = arith.select %22, %23, %15 : vector<4x8x8xi1>, vector<4x8x8xf32>
    %cst_14 = arith.constant dense<0xFF800000> : vector<4x8xf32>
    %25 = vector.multi_reduction <maximumf>, %24, %cst_14 [2] : vector<4x8x8xf32> to vector<4x8xf32>
    %26 = vector.shape_cast %25 : vector<4x8xf32> to vector<4x8x1xf32>
    %27 = vector.broadcast %26 : vector<4x8x1xf32> to vector<4x8x8xf32>
    %28 = arith.subf %24, %27 : vector<4x8x8xf32>
    %29 = math.exp %28 : vector<4x8x8xf32>
    %cst_15 = arith.constant dense<0.000000e+00> : vector<4x8xf32>
    %30 = vector.multi_reduction <add>, %29, %cst_15 [2] : vector<4x8x8xf32> to vector<4x8xf32>
    %31 = vector.shape_cast %30 : vector<4x8xf32> to vector<4x8x1xf32>
    %32 = tpu.reciprocal %31 {approx = true} : vector<4x8x1xf32> -> vector<4x8x1xf32>
    %33 = vector.broadcast %32 : vector<4x8x1xf32> to vector<4x8x8xf32>
    %34 = arith.mulf %29, %33 : vector<4x8x8xf32>
    "tpu.trace_start"() <{level = 10 : i32, message = "hqk,khd->qhd"}> : () -> ()
    %cst_16 = arith.constant dense<0.000000e+00> : vector<4x32x8xf32>
    %35 = tpu.matmul %14, %34, %cst_16 {dimension_numbers = #tpu.dot_dimension_numbers<[0], [2], [2], [1], [0, 1, 0, 2, 1, 1], [1], [0]>} : vector<8x4x32xf32>, vector<4x8x8xf32>, vector<4x32x8xf32> -> vector<4x32x8xf32>
    %36 = tpu.transpose %35, [2, 0, 1] : vector<4x32x8xf32> -> vector<8x4x32xf32>
    "tpu.trace_stop"() : () -> ()
    %37 = vector.shape_cast %36 : vector<8x4x32xf32> to vector<8x128xf32>
    %c0_17 = arith.constant 0 : index
    %c0_18 = arith.constant 0 : index
    %38 = vector.load %arg5[%c0_17, %c0_18] : memref<128x128xf32, #tpu.memory_space<vmem>>, vector<128x128xf32>
    %cst_19 = arith.constant dense<0.000000e+00> : vector<8x128xf32>
    %39 = tpu.matmul %37, %38, %cst_19 {dimension_numbers = #tpu.dot_dimension_numbers<[1], [0], [0], [1], [0, 0, 1, 1], [], []>} : vector<8x128xf32>, vector<128x128xf32>, vector<8x128xf32> -> vector<8x128xf32>
    %c0_20 = arith.constant 0 : index
    %c0_21 = arith.constant 0 : index
    %40 = vector.load %arg6[%c0_20, %c0_21] : memref<1x128xf32, #tpu.memory_space<vmem>>, vector<1x128xf32>
    %41 = vector.broadcast %40 : vector<1x128xf32> to vector<8x128xf32>
    %42 = arith.addf %39, %41 : vector<8x128xf32>
    %43 = arith.addf %1, %42 : vector<8x128xf32>
    %c0_22 = arith.constant 0 : index
    %c0_23 = arith.constant 0 : index
    %44 = vector.load %arg7[%c0_22, %c0_23] : memref<1x128xf32, #tpu.memory_space<vmem>>, vector<1x128xf32>
    %c0_24 = arith.constant 0 : index
    %c0_25 = arith.constant 0 : index
    %45 = vector.load %arg8[%c0_24, %c0_25] : memref<1x128xf32, #tpu.memory_space<vmem>>, vector<1x128xf32>
    %cst_26 = arith.constant dense<0.000000e+00> : vector<8xf32>
    %46 = vector.multi_reduction <add>, %43, %cst_26 [1] : vector<8x128xf32> to vector<8xf32>
    %47 = vector.shape_cast %46 : vector<8xf32> to vector<8x1xf32>
    %cst_27 = arith.constant 1.280000e+02 : f32
    %48 = vector.broadcast %cst_27 : f32 to vector<8x1xf32>
    %49 = arith.divf %47, %48 : vector<8x1xf32>
    %50 = vector.broadcast %49 : vector<8x1xf32> to vector<8x128xf32>
    %51 = arith.subf %43, %50 : vector<8x128xf32>
    %52 = arith.mulf %51, %51 : vector<8x128xf32>
    %cst_28 = arith.constant dense<0.000000e+00> : vector<8xf32>
    %53 = vector.multi_reduction <add>, %52, %cst_28 [1] : vector<8x128xf32> to vector<8xf32>
    %54 = vector.shape_cast %53 : vector<8xf32> to vector<8x1xf32>
    %cst_29 = arith.constant 1.280000e+02 : f32
    %55 = vector.broadcast %cst_29 : f32 to vector<8x1xf32>
    %56 = arith.divf %54, %55 : vector<8x1xf32>
    %57 = vector.broadcast %49 : vector<8x1xf32> to vector<8x128xf32>
    %58 = arith.subf %43, %57 : vector<8x128xf32>
    %cst_30 = arith.constant 9.99999974E-6 : f32
    %59 = vector.broadcast %cst_30 : f32 to vector<8x1xf32>
    %60 = arith.addf %56, %59 : vector<8x1xf32>
    %61 = math.rsqrt %60 : vector<8x1xf32>
    %62 = vector.broadcast %61 : vector<8x1xf32> to vector<8x128xf32>
    %63 = arith.mulf %58, %62 : vector<8x128xf32>
    %64 = vector.broadcast %44 : vector<1x128xf32> to vector<8x128xf32>
    %65 = arith.mulf %63, %64 : vector<8x128xf32>
    %66 = vector.broadcast %45 : vector<1x128xf32> to vector<8x128xf32>
    %67 = arith.addf %65, %66 : vector<8x128xf32>
    %c0_31 = arith.constant 0 : index
    %c0_32 = arith.constant 0 : index
    %68 = vector.load %arg9[%c0_31, %c0_32] : memref<128x256xf32, #tpu.memory_space<vmem>>, vector<128x256xf32>
    %cst_33 = arith.constant dense<0.000000e+00> : vector<8x256xf32>
    %69 = tpu.matmul %67, %68, %cst_33 {dimension_numbers = #tpu.dot_dimension_numbers<[1], [0], [0], [1], [0, 0, 1, 1], [], []>} : vector<8x128xf32>, vector<128x256xf32>, vector<8x256xf32> -> vector<8x256xf32>
    %c0_34 = arith.constant 0 : index
    %c0_35 = arith.constant 0 : index
    %70 = vector.load %arg10[%c0_34, %c0_35] : memref<1x256xf32, #tpu.memory_space<vmem>>, vector<1x256xf32>
    %71 = vector.broadcast %70 : vector<1x256xf32> to vector<8x256xf32>
    %72 = arith.addf %69, %71 : vector<8x256xf32>
    %cst_36 = arith.constant 5.000000e-01 : f32
    %73 = vector.broadcast %cst_36 : f32 to vector<8x256xf32>
    %74 = arith.mulf %73, %72 : vector<8x256xf32>
    %cst_37 = arith.constant 0.707106769 : f32
    %75 = vector.broadcast %cst_37 : f32 to vector<8x256xf32>
    %76 = arith.mulf %72, %75 : vector<8x256xf32>
    %77 = math.erf %76 : vector<8x256xf32>
    %cst_38 = arith.constant 1.000000e+00 : f32
    %78 = vector.broadcast %cst_38 : f32 to vector<8x256xf32>
    %79 = arith.addf %78, %77 : vector<8x256xf32>
    %80 = arith.mulf %74, %79 : vector<8x256xf32>
    %c0_39 = arith.constant 0 : index
    %c0_40 = arith.constant 0 : index
    %81 = vector.load %arg11[%c0_39, %c0_40] : memref<256x128xf32, #tpu.memory_space<vmem>>, vector<256x128xf32>
    %cst_41 = arith.constant dense<0.000000e+00> : vector<8x128xf32>
    %82 = tpu.matmul %80, %81, %cst_41 {dimension_numbers = #tpu.dot_dimension_numbers<[1], [0], [0], [1], [0, 0, 1, 1], [], []>} : vector<8x256xf32>, vector<256x128xf32>, vector<8x128xf32> -> vector<8x128xf32>
    %c0_42 = arith.constant 0 : index
    %c0_43 = arith.constant 0 : index
    %83 = vector.load %arg12[%c0_42, %c0_43] : memref<1x128xf32, #tpu.memory_space<vmem>>, vector<1x128xf32>
    %84 = vector.broadcast %83 : vector<1x128xf32> to vector<8x128xf32>
    %85 = arith.addf %82, %84 : vector<8x128xf32>
    %86 = arith.addf %85, %67 : vector<8x128xf32>
    %c0_44 = arith.constant 0 : index
    %c0_45 = arith.constant 0 : index
    %87 = vector.load %arg13[%c0_44, %c0_45] : memref<1x128xf32, #tpu.memory_space<vmem>>, vector<1x128xf32>
    %c0_46 = arith.constant 0 : index
    %c0_47 = arith.constant 0 : index
    %88 = vector.load %arg14[%c0_46, %c0_47] : memref<1x128xf32, #tpu.memory_space<vmem>>, vector<1x128xf32>
    %cst_48 = arith.constant dense<0.000000e+00> : vector<8xf32>
    %89 = vector.multi_reduction <add>, %86, %cst_48 [1] : vector<8x128xf32> to vector<8xf32>
    %90 = vector.shape_cast %89 : vector<8xf32> to vector<8x1xf32>
    %cst_49 = arith.constant 1.280000e+02 : f32
    %91 = vector.broadcast %cst_49 : f32 to vector<8x1xf32>
    %92 = arith.divf %90, %91 : vector<8x1xf32>
    %93 = vector.broadcast %92 : vector<8x1xf32> to vector<8x128xf32>
    %94 = arith.subf %86, %93 : vector<8x128xf32>
    %95 = arith.mulf %94, %94 : vector<8x128xf32>
    %cst_50 = arith.constant dense<0.000000e+00> : vector<8xf32>
    %96 = vector.multi_reduction <add>, %95, %cst_50 [1] : vector<8x128xf32> to vector<8xf32>
    %97 = vector.shape_cast %96 : vector<8xf32> to vector<8x1xf32>
    %cst_51 = arith.constant 1.280000e+02 : f32
    %98 = vector.broadcast %cst_51 : f32 to vector<8x1xf32>
    %99 = arith.divf %97, %98 : vector<8x1xf32>
    %100 = vector.broadcast %92 : vector<8x1xf32> to vector<8x128xf32>
    %101 = arith.subf %86, %100 : vector<8x128xf32>
    %cst_52 = arith.constant 9.99999974E-6 : f32
    %102 = vector.broadcast %cst_52 : f32 to vector<8x1xf32>
    %103 = arith.addf %99, %102 : vector<8x1xf32>
    %104 = math.rsqrt %103 : vector<8x1xf32>
    %105 = vector.broadcast %104 : vector<8x1xf32> to vector<8x128xf32>
    %106 = arith.mulf %101, %105 : vector<8x128xf32>
    %107 = vector.broadcast %87 : vector<1x128xf32> to vector<8x128xf32>
    %108 = arith.mulf %106, %107 : vector<8x128xf32>
    %109 = vector.broadcast %88 : vector<1x128xf32> to vector<8x128xf32>
    %110 = arith.addf %108, %109 : vector<8x128xf32>
    %c0_53 = arith.constant 0 : index
    %c0_54 = arith.constant 0 : index
    %c0_55 = arith.constant 0 : index
    %111 = vector.load %arg15[%c0_53, %c0_54, %c0_55] : memref<1x8x128xf32, #tpu.memory_space<vmem>>, vector<1x8x128xf32>
    %112 = vector.shape_cast %111 : vector<1x8x128xf32> to vector<8x128xf32>
    %113 = vector.shape_cast %110 : vector<8x128xf32> to vector<1x8x128xf32>
    tpu.vector_store %arg15[%c0_53, %c0_54, %c0_55], %113 {strides = array<i32>} : memref<1x8x128xf32, #tpu.memory_space<vmem>>, vector<1x8x128xf32>,
    return
  }
  func.func @transform_0(%arg0: i32) -> (i32, i32, i32) {
    %c0_i32 = arith.constant 0 : i32
    %c0_i32_0 = arith.constant 0 : i32
    %c0_i32_1 = arith.constant 0 : i32
    return %arg0, %c0_i32, %c0_i32_0 : i32, i32, i32
  }
  func.func @transform_1(%arg0: i32) -> (i32, i32, i32) {
    %c0_i32 = arith.constant 0 : i32
    %c0_i32_0 = arith.constant 0 : i32
    %c0_i32_1 = arith.constant 0 : i32
    return %arg0, %c0_i32, %c0_i32_0 : i32, i32, i32
  }
  func.func @transform_2(%arg0: i32) -> (i32, i32) {
    %c0_i32 = arith.constant 0 : i32
    %c0_i32_0 = arith.constant 0 : i32
    %c0_i32_1 = arith.constant 0 : i32
    return %c0_i32, %c0_i32_0 : i32, i32
  }
  func.func @transform_3(%arg0: i32) -> (i32, i32) {
    %c0_i32 = arith.constant 0 : i32
    %c0_i32_0 = arith.constant 0 : i32
    %c0_i32_1 = arith.constant 0 : i32
    return %c0_i32, %c0_i32_0 : i32, i32
  }
  func.func @transform_4(%arg0: i32) -> (i32, i32) {
    %c0_i32 = arith.constant 0 : i32
    %c0_i32_0 = arith.constant 0 : i32
    %c0_i32_1 = arith.constant 0 : i32
    return %c0_i32, %c0_i32_0 : i32, i32
  }
  func.func @transform_5(%arg0: i32) -> (i32, i32) {
    %c0_i32 = arith.constant 0 : i32
    %c0_i32_0 = arith.constant 0 : i32
    %c0_i32_1 = arith.constant 0 : i32
    return %c0_i32, %c0_i32_0 : i32, i32
  }
  func.func @transform_6(%arg0: i32) -> (i32, i32) {
    %c0_i32 = arith.constant 0 : i32
    %c0_i32_0 = arith.constant 0 : i32
    %c0_i32_1 = arith.constant 0 : i32
    return %c0_i32, %c0_i32_0 : i32, i32
  }
  func.func @transform_7(%arg0: i32) -> (i32, i32) {
    %c0_i32 = arith.constant 0 : i32
    %c0_i32_0 = arith.constant 0 : i32
    %c0_i32_1 = arith.constant 0 : i32
    return %c0_i32, %c0_i32_0 : i32, i32
  }
  func.func @transform_8(%arg0: i32) -> (i32, i32) {
    %c0_i32 = arith.constant 0 : i32
    %c0_i32_0 = arith.constant 0 : i32
    %c0_i32_1 = arith.constant 0 : i32
    return %c0_i32, %c0_i32_0 : i32, i32
  }
  func.func @transform_9(%arg0: i32) -> (i32, i32) {
    %c0_i32 = arith.constant 0 : i32
    %c0_i32_0 = arith.constant 0 : i32
    %c0_i32_1 = arith.constant 0 : i32
    return %c0_i32, %c0_i32_0 : i32, i32
  }
  func.func @transform_10(%arg0: i32) -> (i32, i32) {
    %c0_i32 = arith.constant 0 : i32
    %c0_i32_0 = arith.constant 0 : i32
    %c0_i32_1 = arith.constant 0 : i32
    return %c0_i32, %c0_i32_0 : i32, i32
  }
  func.func @transform_11(%arg0: i32) -> (i32, i32) {
    %c0_i32 = arith.constant 0 : i32
    %c0_i32_0 = arith.constant 0 : i32
    %c0_i32_1 = arith.constant 0 : i32
    return %c0_i32, %c0_i32_0 : i32, i32
  }
  func.func @transform_12(%arg0: i32) -> (i32, i32) {
    %c0_i32 = arith.constant 0 : i32
    %c0_i32_0 = arith.constant 0 : i32
    %c0_i32_1 = arith.constant 0 : i32
    return %c0_i32, %c0_i32_0 : i32, i32
  }
  func.func @transform_13(%arg0: i32) -> (i32, i32) {
    %c0_i32 = arith.constant 0 : i32
    %c0_i32_0 = arith.constant 0 : i32
    %c0_i32_1 = arith.constant 0 : i32
    return %c0_i32, %c0_i32_0 : i32, i32
  }
  func.func @transform_14(%arg0: i32) -> (i32, i32, i32) {
    %c0_i32 = arith.constant 0 : i32
    %c0_i32_0 = arith.constant 0 : i32
    %c0_i32_1 = arith.constant 0 : i32
    return %arg0, %c0_i32, %c0_i32_0 : i32, i32, i32
  }
}

</mosaic_0001>

<llo_original>
// kernel: tpu_custom_call.1
$region0: #{tpu_custom_call.1}
  #allocation0 [shape = 'u32[]', space=smem, size = 0x4, offset = 0x4, fixed_abs, tag = 'smem constant byte address 0x4 - core index']
  #allocation1 [shape = 'u32[72,128]{1,0:T(1,128)}', space=vmem, size = 0x9000, scoped, tag = 'internal scratch']
  %s0 = inlined_call_operand.hbm [shape: f32[2,8,128], index: 0, kind: input, shape index: {}]
  %s1 = inlined_call_operand.hbm [shape: s32[2,1,8], index: 1, kind: input, shape index: {}]
  %s2 = inlined_call_operand.hbm [shape: f32[128,384], index: 2, kind: input, shape index: {}]
  %s3 = inlined_call_operand.hbm [shape: f32[1,384], index: 3, kind: input, shape index: {}]
  %s4 = inlined_call_operand.hbm [shape: f32[128,128], index: 4, kind: input, shape index: {}]
  %s5 = inlined_call_operand.vmem [shape: f32[1,128], index: 5, kind: input, shape index: {}]
  %s6 = inlined_call_operand.vmem [shape: f32[1,128], index: 6, kind: input, shape index: {}]
  %s7 = inlined_call_operand.vmem [shape: f32[1,128], index: 7, kind: input, shape index: {}]
  %s8 = inlined_call_operand.hbm [shape: f32[128,256], index: 8, kind: input, shape index: {}]
  %s9 = inlined_call_operand.vmem [shape: f32[1,256], index: 9, kind: input, shape index: {}]
  %s10 = inlined_call_operand.hbm [shape: f32[256,128], index: 10, kind: input, shape index: {}]
  %s11 = inlined_call_operand.vmem [shape: f32[1,128], index: 11, kind: input, shape index: {}]
  %s12 = inlined_call_operand.vmem [shape: f32[1,128], index: 12, kind: input, shape index: {}]
  %s13 = inlined_call_operand.vmem [shape: f32[1,128], index: 13, kind: input, shape index: {}]
  %s14 = inlined_call_operand.hbm [shape: f32[2,8,128], index: 14, kind: output, shape index: {}]
  %s15 = sld [smem:[#allocation0]]
  $region117: #{tpu_custom_call.1} parent=0
    _
  %s17 = ssub.s32 1, %s15
  %s18 = scalar_select 0, %s17, %s15
  $region1: #{tpu_custom_call.1} parent=0
    #allocation2 [shape = 'u8[8192]{0}', space=vmem, size = 0x2000, scoped, tag = 'input window, operand 0']
    #allocation3 [shape = 's32[2]{0}', space=sflag, size = 0x8, scoped, tag = 'scoped memory for tpu_custom_call.1']
    #allocation4 [shape = 's32[2]{0}', space=sflag, size = 0x8, scoped, tag = 'scoped memory for tpu_custom_call.1']
    #allocation5 [shape = 'u8[1024]{0}', space=vmem, size = 0x400, scoped, tag = 'input window, operand 1']
    #allocation6 [shape = 's32[2]{0}', space=sflag, size = 0x8, scoped, tag = 'scoped memory for tpu_custom_call.1']
    #allocation7 [shape = 'u8[196608]{0}', space=vmem, size = 0x30000, scoped, tag = 'input window, operand 2, single buffered']
    #allocation8 [shape = 'u8[1536]{0}', space=vmem, size = 0x800, scoped, tag = 'input window, operand 3, single buffered']
    #allocation9 [shape = 's32[1]{0}', space=sflag, size = 0x4, scoped, tag = 'scoped memory for tpu_custom_call.1']
    #allocation10 [shape = 'u8[65536]{0}', space=vmem, size = 0x10000, scoped, tag = 'input window, operand 4, single buffered']
    #allocation11 [shape = 'u8[131072]{0}', space=vmem, size = 0x20000, scoped, tag = 'input window, operand 8, single buffered']
    #allocation12 [shape = 's32[1]{0}', space=sflag, size = 0x4, scoped, tag = 'scoped memory for tpu_custom_call.1']
    #allocation13 [shape = 'u8[131072]{0}', space=vmem, size = 0x20000, scoped, tag = 'input window, operand 10, single buffered']
    #allocation14 [shape = 'u8[8192]{0}', space=vmem, size = 0x2000, scoped, tag = 'output window, operand 0']
    %19 = vsyncpa [#allocation3], 0
    %s20 = scalar_lea.sflag [#allocation3], 1
    %21 = vsyncpa %s20, 0
    %22 = vsyncpa [#allocation6], 0
    %s23 = scalar_lea.sflag [#allocation6], 1
    %24 = vsyncpa %s23, 0
    %25 = vsyncpa [#allocation9], 0
    %26 = vsyncpa [#allocation12], 0
    %27 = vsyncpa [#allocation4], 0
    %s28 = scalar_lea.sflag [#allocation4], 1
    %29 = vsyncpa %s28, 0
    loop: start=0, step=1, limit=4
    $region2: #{tpu_custom_call.1} parent=1 // loop_pre_header
      _
    $region3: #{tpu_custom_call.1} parent=1 // loop_header
      %s31 = sphi 0, %s35
      %p32 = scmp.ge.s32.totalorder %s31, 4
      %s41 = sphi 0, %s43
      %s44 = sphi 0, %s41
      %s45 = sphi 0, %s44
      %s61 = sphi 0, %s45
      %s67 = sphi 0, %s69
      %s70 = sphi 0, %s67
      %s71 = sphi 0, %s70
      %s87 = sphi 0, %s71
      %s91 = sphi 0, %s91
      %s93 = sphi 0, %s91
      %s94 = sphi 0, %s93
      %s108 = sphi 0, %s94
      %s112 = sphi 0, %s112
      %s114 = sphi 0, %s112
      %s115 = sphi 0, %s114
      %s129 = sphi 0, %s115
      %s133 = sphi 0, %s133
      %s135 = sphi 0, %s133
      %s136 = sphi 0, %s135
      %s150 = sphi 0, %s136
      %s154 = sphi 0, %s154
      %s156 = sphi 0, %s154
      %s157 = sphi 0, %s156
      %s171 = sphi 0, %s157
      %s175 = sphi 0, %s175
      %s177 = sphi 0, %s175
      %s178 = sphi 0, %s177
      %s192 = sphi 0, %s178
      %s196 = sphi 0, %s196
      %s198 = sphi 0, %s196
      %s199 = sphi 0, %s198
      %s213 = sphi 0, %s199
      %s217 = sphi 0, %s217
      %s219 = sphi 0, %s217
      %s220 = sphi 0, %s219
      %s234 = sphi 0, %s220
      %s238 = sphi 0, %s238
      %s240 = sphi 0, %s238
      %s241 = sphi 0, %s240
      %s255 = sphi 0, %s241
      %s259 = sphi 0, %s259
      %s261 = sphi 0, %s259
      %s262 = sphi 0, %s261
      %s276 = sphi 0, %s262
      %s280 = sphi 0, %s280
      %s282 = sphi 0, %s280
      %s283 = sphi 0, %s282
      %s297 = sphi 0, %s283
      %s301 = sphi 0, %s301
      %s303 = sphi 0, %s301
      %s304 = sphi 0, %s303
      %s318 = sphi 0, %s304
      %s322 = sphi 0, %s322
      %s324 = sphi 0, %s322
      %s325 = sphi 0, %s324
      %s339 = sphi 0, %s325
      %s345 = sphi 0, %s347
      %s348 = sphi 0, %s345
      %s349 = sphi 0, %s348
      %s365 = sphi 0, %s349
    $region4: #{tpu_custom_call.1} parent=1 // loop_header_branch
      %34 = sbr.rel (%p32) target = $region8
    $region5: #{tpu_custom_call.1} parent=1 // loop_body
      %s36 = ssub.s32 %s31, 1
      %s37 = ssub.s32 %s31, 2
      %s38 = sadd.s32 %s31, 1
      %s39 = ssub.s32 %s31, %s38
      %p40 = scmp.eq.s32.totalorder %s39, 0
      %s42 = sadd.s32 %s41, 1
      %s43 = scalar_select %p40, %s41, %s42
      %p46 = pneg %p40
      %p47 = scmp.eq.s32.totalorder %s31, 1
      %p48 = por %p46, %p47
      %p49 = scmp.ne.s32.totalorder %s41, %s44
      %p50 = scmp.eq.s32.totalorder %s31, 0
      %p51 = por %p49, %p50
      %p52 = scmp.ne.s32.totalorder %s41, %s44
      %p53 = scmp.eq.s32.totalorder %s36, 1
      %p54 = por %p52, %p53
      %p55 = scmp.ne.s32.totalorder %s44, %s45
      %p56 = scmp.eq.s32.totalorder %s36, 0
      %p57 = por %p55, %p56
      %p58 = scmp.ne.s32.totalorder %s44, %s45
      %p59 = scmp.eq.s32.totalorder %s37, 1
      %p60 = por %p58, %p59
      %p62 = scmp.ne.s32.totalorder %s45, %s61
      %p63 = scmp.eq.s32.totalorder %s37, 0
      %p64 = por %p62, %p63
      %s65 = ssub.s32 %s31, %s38
      %p66 = scmp.eq.s32.totalorder %s65, 0
      %s68 = sadd.s32 %s67, 1
      %s69 = scalar_select %p66, %s67, %s68
      %p72 = pneg %p66
      %p73 = scmp.eq.s32.totalorder %s31, 1
      %p74 = por %p72, %p73
      %p75 = scmp.ne.s32.totalorder %s67, %s70
      %p76 = scmp.eq.s32.totalorder %s31, 0
      %p77 = por %p75, %p76
      %p78 = scmp.ne.s32.totalorder %s67, %s70
      %p79 = scmp.eq.s32.totalorder %s36, 1
      %p80 = por %p78, %p79
      %p81 = scmp.ne.s32.totalorder %s70, %s71
      %p82 = scmp.eq.s32.totalorder %s36, 0
      %p83 = por %p81, %p82
      %p84 = scmp.ne.s32.totalorder %s70, %s71
      %p85 = scmp.eq.s32.totalorder %s37, 1
      %p86 = por %p84, %p85
      %p88 = scmp.ne.s32.totalorder %s71, %s87
      %p89 = scmp.eq.s32.totalorder %s37, 0
      %p90 = por %p88, %p89
      %s92 = sadd.s32 %s91, 1
      %p95 = scmp.eq.s32.totalorder %s31, 1
      %p96 = scmp.ne.s32.totalorder %s91, %s93
      %p97 = scmp.eq.s32.totalorder %s31, 0
      %p98 = por %p96, %p97
      %p99 = scmp.ne.s32.totalorder %s91, %s93
      %p100 = scmp.eq.s32.totalorder %s36, 1
      %p101 = por %p99, %p100
      %p102 = scmp.ne.s32.totalorder %s93, %s94
      %p103 = scmp.eq.s32.totalorder %s36, 0
      %p104 = por %p102, %p103
      %p105 = scmp.ne.s32.totalorder %s93, %s94
      %p106 = scmp.eq.s32.totalorder %s37, 1
      %p107 = por %p105, %p106
      %p109 = scmp.ne.s32.totalorder %s94, %s108
      %p110 = scmp.eq.s32.totalorder %s37, 0
      %p111 = por %p109, %p110
      %s113 = sadd.s32 %s112, 1
      %p116 = scmp.eq.s32.totalorder %s31, 1
      %p117 = scmp.ne.s32.totalorder %s112, %s114
      %p118 = scmp.eq.s32.totalorder %s31, 0
      %p119 = por %p117, %p118
      %p120 = scmp.ne.s32.totalorder %s112, %s114
      %p121 = scmp.eq.s32.totalorder %s36, 1
      %p122 = por %p120, %p121
      %p123 = scmp.ne.s32.totalorder %s114, %s115
      %p124 = scmp.eq.s32.totalorder %s36, 0
      %p125 = por %p123, %p124
      %p126 = scmp.ne.s32.totalorder %s114, %s115
      %p127 = scmp.eq.s32.totalorder %s37, 1
      %p128 = por %p126, %p127
      %p130 = scmp.ne.s32.totalorder %s115, %s129
      %p131 = scmp.eq.s32.totalorder %s37, 0
      %p132 = por %p130, %p131
      %s134 = sadd.s32 %s133, 1
      %p137 = scmp.eq.s32.totalorder %s31, 1
      %p138 = scmp.ne.s32.totalorder %s133, %s135
      %p139 = scmp.eq.s32.totalorder %s31, 0
      %p140 = por %p138, %p139
      %p141 = scmp.ne.s32.totalorder %s133, %s135
      %p142 = scmp.eq.s32.totalorder %s36, 1
      %p143 = por %p141, %p142
      %p144 = scmp.ne.s32.totalorder %s135, %s136
      %p145 = scmp.eq.s32.totalorder %s36, 0
      %p146 = por %p144, %p145
      %p147 = scmp.ne.s32.totalorder %s135, %s136
      %p148 = scmp.eq.s32.totalorder %s37, 1
      %p149 = por %p147, %p148
      %p151 = scmp.ne.s32.totalorder %s136, %s150
      %p152 = scmp.eq.s32.totalorder %s37, 0
      %p153 = por %p151, %p152
      %s155 = sadd.s32 %s154, 1
      %p158 = scmp.eq.s32.totalorder %s31, 1
      %p159 = scmp.ne.s32.totalorder %s154, %s156
      %p160 = scmp.eq.s32.totalorder %s31, 0
      %p161 = por %p159, %p160
      %p162 = scmp.ne.s32.totalorder %s154, %s156
      %p163 = scmp.eq.s32.totalorder %s36, 1
      %p164 = por %p162, %p163
      %p165 = scmp.ne.s32.totalorder %s156, %s157
      %p166 = scmp.eq.s32.totalorder %s36, 0
      %p167 = por %p165, %p166
      %p168 = scmp.ne.s32.totalorder %s156, %s157
      %p169 = scmp.eq.s32.totalorder %s37, 1
      %p170 = por %p168, %p169
      %p172 = scmp.ne.s32.totalorder %s157, %s171
      %p173 = scmp.eq.s32.totalorder %s37, 0
      %p174 = por %p172, %p173
      %s176 = sadd.s32 %s175, 1
      %p179 = scmp.eq.s32.totalorder %s31, 1
      %p180 = scmp.ne.s32.totalorder %s175, %s177
      %p181 = scmp.eq.s32.totalorder %s31, 0
      %p182 = por %p180, %p181
      %p183 = scmp.ne.s32.totalorder %s175, %s177
      %p184 = scmp.eq.s32.totalorder %s36, 1
      %p185 = por %p183, %p184
      %p186 = scmp.ne.s32.totalorder %s177, %s178
      %p187 = scmp.eq.s32.totalorder %s36, 0
      %p188 = por %p186, %p187
      %p189 = scmp.ne.s32.totalorder %s177, %s178
      %p190 = scmp.eq.s32.totalorder %s37, 1
      %p191 = por %p189, %p190
      %p193 = scmp.ne.s32.totalorder %s178, %s192
      %p194 = scmp.eq.s32.totalorder %s37, 0
      %p195 = por %p193, %p194
      %s197 = sadd.s32 %s196, 1
      %p200 = scmp.eq.s32.totalorder %s31, 1
      %p201 = scmp.ne.s32.totalorder %s196, %s198
      %p202 = scmp.eq.s32.totalorder %s31, 0
      %p203 = por %p201, %p202
      %p204 = scmp.ne.s32.totalorder %s196, %s198
      %p205 = scmp.eq.s32.totalorder %s36, 1
      %p206 = por %p204, %p205
      %p207 = scmp.ne.s32.totalorder %s198, %s199
      %p208 = scmp.eq.s32.totalorder %s36, 0
      %p209 = por %p207, %p208
      %p210 = scmp.ne.s32.totalorder %s198, %s199
      %p211 = scmp.eq.s32.totalorder %s37, 1
      %p212 = por %p210, %p211
      %p214 = scmp.ne.s32.totalorder %s199, %s213
      %p215 = scmp.eq.s32.totalorder %s37, 0
      %p216 = por %p214, %p215
      %s218 = sadd.s32 %s217, 1
      %p221 = scmp.eq.s32.totalorder %s31, 1
      %p222 = scmp.ne.s32.totalorder %s217, %s219
      %p223 = scmp.eq.s32.totalorder %s31, 0
      %p224 = por %p222, %p223
      %p225 = scmp.ne.s32.totalorder %s217, %s219
      %p226 = scmp.eq.s32.totalorder %s36, 1
      %p227 = por %p225, %p226
      %p228 = scmp.ne.s32.totalorder %s219, %s220
      %p229 = scmp.eq.s32.totalorder %s36, 0
      %p230 = por %p228, %p229
      %p231 = scmp.ne.s32.totalorder %s219, %s220
      %p232 = scmp.eq.s32.totalorder %s37, 1
      %p233 = por %p231, %p232
      %p235 = scmp.ne.s32.totalorder %s220, %s234
      %p236 = scmp.eq.s32.totalorder %s37, 0
      %p237 = por %p235, %p236
      %s239 = sadd.s32 %s238, 1
      %p242 = scmp.eq.s32.totalorder %s31, 1
      %p243 = scmp.ne.s32.totalorder %s238, %s240
      %p244 = scmp.eq.s32.totalorder %s31, 0
      %p245 = por %p243, %p244
      %p246 = scmp.ne.s32.totalorder %s238, %s240
      %p247 = scmp.eq.s32.totalorder %s36, 1
      %p248 = por %p246, %p247
      %p249 = scmp.ne.s32.totalorder %s240, %s241
      %p250 = scmp.eq.s32.totalorder %s36, 0
      %p251 = por %p249, %p250
      %p252 = scmp.ne.s32.totalorder %s240, %s241
      %p253 = scmp.eq.s32.totalorder %s37, 1
      %p254 = por %p252, %p253
      %p256 = scmp.ne.s32.totalorder %s241, %s255
      %p257 = scmp.eq.s32.totalorder %s37, 0
      %p258 = por %p256, %p257
      %s260 = sadd.s32 %s259, 1
      %p263 = scmp.eq.s32.totalorder %s31, 1
      %p264 = scmp.ne.s32.totalorder %s259, %s261
      %p265 = scmp.eq.s32.totalorder %s31, 0
      %p266 = por %p264, %p265
      %p267 = scmp.ne.s32.totalorder %s259, %s261
      %p268 = scmp.eq.s32.totalorder %s36, 1
      %p269 = por %p267, %p268
      %p270 = scmp.ne.s32.totalorder %s261, %s262
      %p271 = scmp.eq.s32.totalorder %s36, 0
      %p272 = por %p270, %p271
      %p273 = scmp.ne.s32.totalorder %s261, %s262
      %p274 = scmp.eq.s32.totalorder %s37, 1
      %p275 = por %p273, %p274
      %p277 = scmp.ne.s32.totalorder %s262, %s276
      %p278 = scmp.eq.s32.totalorder %s37, 0
      %p279 = por %p277, %p278
      %s281 = sadd.s32 %s280, 1
      %p284 = scmp.eq.s32.totalorder %s31, 1
      %p285 = scmp.ne.s32.totalorder %s280, %s282
      %p286 = scmp.eq.s32.totalorder %s31, 0
      %p287 = por %p285, %p286
      %p288 = scmp.ne.s32.totalorder %s280, %s282
      %p289 = scmp.eq.s32.totalorder %s36, 1
      %p290 = por %p288, %p289
      %p291 = scmp.ne.s32.totalorder %s282, %s283
      %p292 = scmp.eq.s32.totalorder %s36, 0
      %p293 = por %p291, %p292
      %p294 = scmp.ne.s32.totalorder %s282, %s283
      %p295 = scmp.eq.s32.totalorder %s37, 1
      %p296 = por %p294, %p295
      %p298 = scmp.ne.s32.totalorder %s283, %s297
      %p299 = scmp.eq.s32.totalorder %s37, 0
      %p300 = por %p298, %p299
      %s302 = sadd.s32 %s301, 1
      %p305 = scmp.eq.s32.totalorder %s31, 1
      %p306 = scmp.ne.s32.totalorder %s301, %s303
      %p307 = scmp.eq.s32.totalorder %s31, 0
      %p308 = por %p306, %p307
      %p309 = scmp.ne.s32.totalorder %s301, %s303
      %p310 = scmp.eq.s32.totalorder %s36, 1
      %p311 = por %p309, %p310
      %p312 = scmp.ne.s32.totalorder %s303, %s304
      %p313 = scmp.eq.s32.totalorder %s36, 0
      %p314 = por %p312, %p313
      %p315 = scmp.ne.s32.totalorder %s303, %s304
      %p316 = scmp.eq.s32.totalorder %s37, 1
      %p317 = por %p315, %p316
      %p319 = scmp.ne.s32.totalorder %s304, %s318
      %p320 = scmp.eq.s32.totalorder %s37, 0
      %p321 = por %p319, %p320
      %s323 = sadd.s32 %s322, 1
      %p326 = scmp.eq.s32.totalorder %s31, 1
      %p327 = scmp.ne.s32.totalorder %s322, %s324
      %p328 = scmp.eq.s32.totalorder %s31, 0
      %p329 = por %p327, %p328
      %p330 = scmp.ne.s32.totalorder %s322, %s324
      %p331 = scmp.eq.s32.totalorder %s36, 1
      %p332 = por %p330, %p331
      %p333 = scmp.ne.s32.totalorder %s324, %s325
      %p334 = scmp.eq.s32.totalorder %s36, 0
      %p335 = por %p333, %p334
      %p336 = scmp.ne.s32.totalorder %s324, %s325
      %p337 = scmp.eq.s32.totalorder %s37, 1
      %p338 = por %p336, %p337
      %p340 = scmp.ne.s32.totalorder %s325, %s339
      %p341 = scmp.eq.s32.totalorder %s37, 0
      %p342 = por %p340, %p341
      %s343 = ssub.s32 %s31, %s38
      %p344 = scmp.eq.s32.totalorder %s343, 0
      %s346 = sadd.s32 %s345, 1
      %s347 = scalar_select %p344, %s345, %s346
      %p350 = pneg %p344
      %p351 = scmp.eq.s32.totalorder %s31, 1
      %p352 = por %p350, %p351
      %p353 = scmp.ne.s32.totalorder %s345, %s348
      %p354 = scmp.eq.s32.totalorder %s31, 0
      %p355 = por %p353, %p354
      %p356 = scmp.ne.s32.totalorder %s345, %s348
      %p357 = scmp.eq.s32.totalorder %s36, 1
      %p358 = por %p356, %p357
      %p359 = scmp.ne.s32.totalorder %s348, %s349
      %p360 = scmp.eq.s32.totalorder %s36, 0
      %p361 = por %p359, %p360
      %p362 = scmp.ne.s32.totalorder %s348, %s349
      %p363 = scmp.eq.s32.totalorder %s37, 1
      %p364 = por %p362, %p363
      %p366 = scmp.ne.s32.totalorder %s349, %s365
      %p367 = scmp.eq.s32.totalorder %s37, 0
      %p368 = por %p366, %p367
      %p369 = scmp.le.s32.totalorder 1, %s31
      %p370 = scmp.lt.s32.totalorder %s31, 3
      %p371 = pnand %p369, %p370
      %p372 = pneg %p371
      // Predicated region
      $region9: #{tpu_custom_call.1} parent=5 // pred_check
        _
      $region10: #{tpu_custom_call.1} parent=5 // pred_check_branch
        %374 = sbr.rel (%p371) target = $region12
      $region11: #{tpu_custom_call.1} parent=5 // pred_region
        %s375 = ssub.s32 %s31, 1
        // Predicated region
        $region13: #{tpu_custom_call.1} parent=11 // pred_check
          %p376 = pneg %p104
        $region14: #{tpu_custom_call.1} parent=11 // pred_check_branch
          %378 = sbr.rel (%p376) target = $region16
        $region15: #{tpu_custom_call.1} parent=11 // pred_region
          %380 = vsyncadd [#allocation6], 0
          %s381 = sshll.u32 %s2, 4
          %s382 = int_to_ptr.hbm [resolvable:$true] %s381
          %s383 = sshll.u32 [#allocation7], 4
          %s384 = int_to_ptr.vmem [resolvable:$true] %s383
          %389 = dma.hbm_to_vmem [thread:$0]  %s382, 6144, %s384, [#allocation6], 384, 384, 24
        $region16: #{tpu_custom_call.1} parent=11 // pred_fallthru
          _
        // Predicated region
        $region17: #{tpu_custom_call.1} parent=11 // pred_check
          %p390 = pneg %p125
        $region18: #{tpu_custom_call.1} parent=11 // pred_check_branch
          %392 = sbr.rel (%p390) target = $region20
        $region19: #{tpu_custom_call.1} parent=11 // pred_region
          %394 = vsyncadd [#allocation9], 0
          %s396 = sshll.u32 %s3, 4
          %s397 = int_to_ptr.hbm [resolvable:$true] %s396
          %s398 = sshll.u32 [#allocation8], 4
          %s399 = int_to_ptr.vmem [resolvable:$true] %s398
          %401 = dma.hbm_to_vmem [thread:$0]  %s397, 48, %s399, [#allocation9]
        $region20: #{tpu_custom_call.1} parent=11 // pred_fallthru
          _
        // Predicated region
        $region21: #{tpu_custom_call.1} parent=11 // pred_check
          %p402 = pneg %p146
        $region22: #{tpu_custom_call.1} parent=11 // pred_check_branch
          %404 = sbr.rel (%p402) target = $region24
        $region23: #{tpu_custom_call.1} parent=11 // pred_region
          %406 = vsyncadd [#allocation9], 0
          %s407 = sshll.u32 %s4, 4
          %s408 = int_to_ptr.hbm [resolvable:$true] %s407
          %s409 = sshll.u32 [#allocation10], 4
          %s410 = int_to_ptr.vmem [resolvable:$true] %s409
          %415 = dma.hbm_to_vmem [thread:$0]  %s408, 2048, %s410, [#allocation9], 128, 128, 8
        $region24: #{tpu_custom_call.1} parent=11 // pred_fallthru
          _
        // Predicated region
        $region25: #{tpu_custom_call.1} parent=11 // pred_check
          %p416 = pneg %p167
        $region26: #{tpu_custom_call.1} parent=11 // pred_check_branch
          %418 = sbr.rel (%p416) target = $region28
        $region27: #{tpu_custom_call.1} parent=11 // pred_region
          _
        $region28: #{tpu_custom_call.1} parent=11 // pred_fallthru
          _
        // Predicated region
        $region29: #{tpu_custom_call.1} parent=11 // pred_check
          %p419 = pneg %p188
        $region30: #{tpu_custom_call.1} parent=11 // pred_check_branch
          %421 = sbr.rel (%p419) target = $region32
        $region31: #{tpu_custom_call.1} parent=11 // pred_region
          _
        $region32: #{tpu_custom_call.1} parent=11 // pred_fallthru
          _
        // Predicated region
        $region33: #{tpu_custom_call.1} parent=11 // pred_check
          %p422 = pneg %p209
        $region34: #{tpu_custom_call.1} parent=11 // pred_check_branch
          %424 = sbr.rel (%p422) target = $region36
        $region35: #{tpu_custom_call.1} parent=11 // pred_region
          _
        $region36: #{tpu_custom_call.1} parent=11 // pred_fallthru
          _
        // Predicated region
        $region37: #{tpu_custom_call.1} parent=11 // pred_check
          %p425 = pneg %p230
        $region38: #{tpu_custom_call.1} parent=11 // pred_check_branch
          %427 = sbr.rel (%p425) target = $region40
        $region39: #{tpu_custom_call.1} parent=11 // pred_region
          %429 = vsyncadd [#allocation12], 0
          %s430 = sshll.u32 %s8, 4
          %s431 = int_to_ptr.hbm [resolvable:$true] %s430
          %s432 = sshll.u32 [#allocation11], 4
          %s433 = int_to_ptr.vmem [resolvable:$true] %s432
          %438 = dma.hbm_to_vmem [thread:$0]  %s431, 4096, %s433, [#allocation12], 256, 256, 16
        $region40: #{tpu_custom_call.1} parent=11 // pred_fallthru
          _
        // Predicated region
        $region41: #{tpu_custom_call.1} parent=11 // pred_check
          %p439 = pneg %p251
        $region42: #{tpu_custom_call.1} parent=11 // pred_check_branch
          %441 = sbr.rel (%p439) target = $region44
        $region43: #{tpu_custom_call.1} parent=11 // pred_region
          _
        $region44: #{tpu_custom_call.1} parent=11 // pred_fallthru
          _
        // Predicated region
        $region45: #{tpu_custom_call.1} parent=11 // pred_check
          %p442 = pneg %p272
        $region46: #{tpu_custom_call.1} parent=11 // pred_check_branch
          %444 = sbr.rel (%p442) target = $region48
        $region47: #{tpu_custom_call.1} parent=11 // pred_region
          %446 = vsyncadd [#allocation12], 0
          %s447 = sshll.u32 %s10, 4
          %s448 = int_to_ptr.hbm [resolvable:$true] %s447
          %s449 = sshll.u32 [#allocation13], 4
          %s450 = int_to_ptr.vmem [resolvable:$true] %s449
          %455 = dma.hbm_to_vmem [thread:$0]  %s448, 4096, %s450, [#allocation12], 128, 128, 8
        $region48: #{tpu_custom_call.1} parent=11 // pred_fallthru
          _
        // Predicated region
        $region49: #{tpu_custom_call.1} parent=11 // pred_check
          %p456 = pneg %p293
        $region50: #{tpu_custom_call.1} parent=11 // pred_check_branch
          %458 = sbr.rel (%p456) target = $region52
        $region51: #{tpu_custom_call.1} parent=11 // pred_region
          _
        $region52: #{tpu_custom_call.1} parent=11 // pred_fallthru
          _
        // Predicated region
        $region53: #{tpu_custom_call.1} parent=11 // pred_check
          %p459 = pneg %p314
        $region54: #{tpu_custom_call.1} parent=11 // pred_check_branch
          %461 = sbr.rel (%p459) target = $region56
        $region55: #{tpu_custom_call.1} parent=11 // pred_region
          _
        $region56: #{tpu_custom_call.1} parent=11 // pred_fallthru
          _
        // Predicated region
        $region57: #{tpu_custom_call.1} parent=11 // pred_check
          %p462 = pneg %p335
        $region58: #{tpu_custom_call.1} parent=11 // pred_check_branch
          %464 = sbr.rel (%p462) target = $region60
        $region59: #{tpu_custom_call.1} parent=11 // pred_region
          _
        $region60: #{tpu_custom_call.1} parent=11 // pred_fallthru
          _
      $region12: #{tpu_custom_call.1} parent=5 // pred_fallthru
        _
      %p465 = scmp.lt.s32.totalorder %s31, 2
      // Predicated region
      $region61: #{tpu_custom_call.1} parent=5 // pred_check
        %p466 = pneg %p465
      $region62: #{tpu_custom_call.1} parent=5 // pred_check_branch
        %468 = sbr.rel (%p466) target = $region64
      $region63: #{tpu_custom_call.1} parent=5 // pred_region
        // Predicated region
        $region65: #{tpu_custom_call.1} parent=63 // pred_check
          %p469 = pneg %p51
        $region66: #{tpu_custom_call.1} parent=63 // pred_check_branch
          %471 = sbr.rel (%p469) target = $region68
        $region67: #{tpu_custom_call.1} parent=63 // pred_region
          %s472 = sand.u32 %s41, 1
          %s473 = scalar_lea.sflag [#allocation3], %s472
          %s474 = sand.u32 %s41, 1
          %s475 = smul.addr %s474, 8
          %s476 = scalar_lea.vmem [#allocation2], %s475
          %478 = vsyncadd %s473, 0
          %s479 = smul.addr %s31, 8
          %s480 = scalar_lea.hbm %s0, %s479
          %s482 = sshll.u32 %s480, 4
          %s483 = int_to_ptr.hbm [resolvable:$true] %s482
          %s484 = sshll.u32 %s476, 4
          %s485 = int_to_ptr.vmem [resolvable:$true] %s484
          %487 = dma.hbm_to_vmem [thread:$0]  %s483, 128, %s485, %s473
        $region68: #{tpu_custom_call.1} parent=63 // pred_fallthru
          _
        // Predicated region
        $region69: #{tpu_custom_call.1} parent=63 // pred_check
          %p488 = pneg %p77
        $region70: #{tpu_custom_call.1} parent=63 // pred_check_branch
          %490 = sbr.rel (%p488) target = $region72
        $region71: #{tpu_custom_call.1} parent=63 // pred_region
          %s491 = sand.u32 %s31, 1
          %s492 = scalar_lea.sflag [#allocation6], %s491
          %s493 = sand.u32 %s67, 1
          %s494 = scalar_lea.vmem [#allocation5], %s493
          %496 = vsyncadd %s492, 0
          %s497 = scalar_lea.hbm %s1, %s31
          %s499 = sshll.u32 %s497, 4
          %s500 = int_to_ptr.hbm [resolvable:$true] %s499
          %s501 = sshll.u32 %s494, 4
          %s502 = int_to_ptr.vmem [resolvable:$true] %s501
          %504 = dma.hbm_to_vmem [thread:$0]  %s500, 16, %s502, %s492
        $region72: #{tpu_custom_call.1} parent=63 // pred_fallthru
          _
      $region64: #{tpu_custom_call.1} parent=5 // pred_fallthru
        _
      %p505 = scmp.le.s32.totalorder 1, %s31
      %p506 = scmp.lt.s32.totalorder %s31, 3
      %p507 = pnand %p505, %p506
      %p508 = pneg %p507
      // Predicated region
      $region73: #{tpu_custom_call.1} parent=5 // pred_check
        _
      $region74: #{tpu_custom_call.1} parent=5 // pred_check_branch
        %510 = sbr.rel (%p507) target = $region76
      $region75: #{tpu_custom_call.1} parent=5 // pred_region
        %s511 = ssub.s32 %s31, 1
        %s512 = sand.u32 %s44, 1
        %s513 = scalar_lea.sflag [#allocation3], %s512
        %s514 = sand.u32 %s44, 1
        %s515 = smul.addr %s514, 8
        %s516 = scalar_lea.vmem [#allocation2], %s515
        // Predicated region
        $region77: #{tpu_custom_call.1} parent=75 // pred_check
          %p517 = pneg %p57
        $region78: #{tpu_custom_call.1} parent=75 // pred_check_branch
          %519 = sbr.rel (%p517) target = $region80
        $region79: #{tpu_custom_call.1} parent=75 // pred_region
          %521 = dma.done %s513, 128
        $region80: #{tpu_custom_call.1} parent=75 // pred_fallthru
          _
        %s522 = sand.u32 %s36, 1
        %s523 = scalar_lea.sflag [#allocation6], %s522
        %s524 = sand.u32 %s70, 1
        %s525 = scalar_lea.vmem [#allocation5], %s524
        // Predicated region
        $region81: #{tpu_custom_call.1} parent=75 // pred_check
          %p526 = pneg %p83
        $region82: #{tpu_custom_call.1} parent=75 // pred_check_branch
          %528 = sbr.rel (%p526) target = $region84
        $region83: #{tpu_custom_call.1} parent=75 // pred_region
          %530 = dma.done %s523, 16
        $region84: #{tpu_custom_call.1} parent=75 // pred_fallthru
          _
        // Predicated region
        $region85: #{tpu_custom_call.1} parent=75 // pred_check
          %p531 = pneg %p104
        $region86: #{tpu_custom_call.1} parent=75 // pred_check_branch
          %533 = sbr.rel (%p531) target = $region88
        $region87: #{tpu_custom_call.1} parent=75 // pred_region
          %535 = dma.done [#allocation6], 6144
        $region88: #{tpu_custom_call.1} parent=75 // pred_fallthru
          _
        // Predicated region
        $region89: #{tpu_custom_call.1} parent=75 // pred_check
          %p536 = pneg %p125
        $region90: #{tpu_custom_call.1} parent=75 // pred_check_branch
          %538 = sbr.rel (%p536) target = $region92
        $region91: #{tpu_custom_call.1} parent=75 // pred_region
          %540 = dma.done [#allocation9], 48
        $region92: #{tpu_custom_call.1} parent=75 // pred_fallthru
          _
        // Predicated region
        $region93: #{tpu_custom_call.1} parent=75 // pred_check
          %p541 = pneg %p146
        $region94: #{tpu_custom_call.1} parent=75 // pred_check_branch
          %543 = sbr.rel (%p541) target = $region96
        $region95: #{tpu_custom_call.1} parent=75 // pred_region
          %545 = dma.done [#allocation9], 2048
        $region96: #{tpu_custom_call.1} parent=75 // pred_fallthru
          _
        // Predicated region
        $region97: #{tpu_custom_call.1} parent=75 // pred_check
          %p546 = pneg %p230
        $region98: #{tpu_custom_call.1} parent=75 // pred_check_branch
          %548 = sbr.rel (%p546) target = $region100
        $region99: #{tpu_custom_call.1} parent=75 // pred_region
          %550 = dma.done [#allocation12], 4096
        $region100: #{tpu_custom_call.1} parent=75 // pred_fallthru
          _
        // Predicated region
        $region101: #{tpu_custom_call.1} parent=75 // pred_check
          %p551 = pneg %p272
        $region102: #{tpu_custom_call.1} parent=75 // pred_check_branch
          %553 = sbr.rel (%p551) target = $region104
        $region103: #{tpu_custom_call.1} parent=75 // pred_region
          %555 = dma.done [#allocation12], 4096
        $region104: #{tpu_custom_call.1} parent=75 // pred_fallthru
          _
        %s556 = sand.u32 %s44, 1
        %s557 = scalar_lea.sflag [#allocation3], %s556
        %s558 = sand.u32 %s44, 1
        %s559 = smul.addr %s558, 8
        %s560 = scalar_lea.vmem [#allocation2], %s559
        %p561 = pneg %p57
        %p562 = pneg %p54
        %s563 = sand.u32 %s36, 1
        %s564 = scalar_lea.sflag [#allocation6], %s563
        %s565 = sand.u32 %s70, 1
        %s566 = scalar_lea.vmem [#allocation5], %s565
        %p567 = pneg %p83
        %p568 = pneg %p80
        %p569 = pneg %p104
        %p570 = pneg %p101
        %p571 = pneg %p125
        %p572 = pneg %p122
        %p573 = pneg %p146
        %p574 = pneg %p143
        %p575 = pneg %p167
        %p576 = pneg %p164
        %p577 = pneg %p188
        %p578 = pneg %p185
        %p579 = pneg %p209
        %p580 = pneg %p206
        %p581 = pneg %p230
        %p582 = pneg %p227
        %p583 = pneg %p251
        %p584 = pneg %p248
        %p585 = pneg %p272
        %p586 = pneg %p269
        %p587 = pneg %p293
        %p588 = pneg %p290
        %p589 = pneg %p314
        %p590 = pneg %p311
        %p591 = pneg %p335
        %p592 = pneg %p332
        %p593 = pneg %p361
        %p594 = pneg %p358
        %s595 = sand.u32 %s348, 1
        %s596 = scalar_lea.sflag [#allocation4], %s595
        %s597 = sand.u32 %s348, 1
        %s598 = smul.addr %s597, 8
        %s599 = scalar_lea.vmem [#allocation14], %s598
        %v600 = vld [vmem:[%s516] sm:$0xff]
        %v601 = vld [vmem:[#allocation7] sm:$0xff]
        %v602 = vld [vmem:[#allocation7 + $0x8] sm:$0xff]
        %v603 = vld [vmem:[#allocation7 + $0x10] sm:$0xff]
        %v604 = vld [vmem:[#allocation7 + $0x18] sm:$0xff]
        %v605 = vld [vmem:[#allocation7 + $0x20] sm:$0xff]
        %v606 = vld [vmem:[#allocation7 + $0x28] sm:$0xff]
        %v607 = vld [vmem:[#allocation7 + $0x30] sm:$0xff]
        %v608 = vld [vmem:[#allocation7 + $0x38] sm:$0xff]
        %v609 = vld [vmem:[#allocation7 + $0x40] sm:$0xff]
        %v610 = vld [vmem:[#allocation7 + $0x48] sm:$0xff]
        %v611 = vld [vmem:[#allocation7 + $0x50] sm:$0xff]
        %v612 = vld [vmem:[#allocation7 + $0x58] sm:$0xff]
        %v613 = vld [vmem:[#allocation7 + $0x60] sm:$0xff]
        %v614 = vld [vmem:[#allocation7 + $0x68] sm:$0xff]
        %v615 = vld [vmem:[#allocation7 + $0x70] sm:$0xff]
        %v616 = vld [vmem:[#allocation7 + $0x78] sm:$0xff]
        %v617 = vld [vmem:[#allocation7 + $0x80] sm:$0xff]
        %v618 = vld [vmem:[#allocation7 + $0x88] sm:$0xff]
        %v619 = vld [vmem:[#allocation7 + $0x90] sm:$0xff]
        %v620 = vld [vmem:[#allocation7 + $0x98] sm:$0xff]
        %v621 = vld [vmem:[#allocation7 + $0xa0] sm:$0xff]
        %v622 = vld [vmem:[#allocation7 + $0xa8] sm:$0xff]
        %v623 = vld [vmem:[#allocation7 + $0xb0] sm:$0xff]
        %v624 = vld [vmem:[#allocation7 + $0xb8] sm:$0xff]
        %v625 = vld [vmem:[#allocation7 + $0xc0] sm:$0xff]
        %v626 = vld [vmem:[#allocation7 + $0xc8] sm:$0xff]
        %v627 = vld [vmem:[#allocation7 + $0xd0] sm:$0xff]
        %v628 = vld [vmem:[#allocation7 + $0xd8] sm:$0xff]
        %v629 = vld [vmem:[#allocation7 + $0xe0] sm:$0xff]
        %v630 = vld [vmem:[#allocation7 + $0xe8] sm:$0xff]
        %v631 = vld [vmem:[#allocation7 + $0xf0] sm:$0xff]
        %v632 = vld [vmem:[#allocation7 + $0xf8] sm:$0xff]
        %v633 = vld [vmem:[#allocation7 + $0x100] sm:$0xff]
        %v634 = vld [vmem:[#allocation7 + $0x108] sm:$0xff]
        %v635 = vld [vmem:[#allocation7 + $0x110] sm:$0xff]
        %v636 = vld [vmem:[#allocation7 + $0x118] sm:$0xff]
        %v637 = vld [vmem:[#allocation7 + $0x120] sm:$0xff]
        %v638 = vld [vmem:[#allocation7 + $0x128] sm:$0xff]
        %v639 = vld [vmem:[#allocation7 + $0x130] sm:$0xff]
        %v640 = vld [vmem:[#allocation7 + $0x138] sm:$0xff]
        %v641 = vld [vmem:[#allocation7 + $0x140] sm:$0xff]
        %v642 = vld [vmem:[#allocation7 + $0x148] sm:$0xff]
        %v643 = vld [vmem:[#allocation7 + $0x150] sm:$0xff]
        %v644 = vld [vmem:[#allocation7 + $0x158] sm:$0xff]
        %v645 = vld [vmem:[#allocation7 + $0x160] sm:$0xff]
        %v646 = vld [vmem:[#allocation7 + $0x168] sm:$0xff]
        %v647 = vld [vmem:[#allocation7 + $0x170] sm:$0xff]
        %v648 = vld [vmem:[#allocation7 + $0x178] sm:$0xff]
        %v649 = vld [vmem:[#allocation8] sm:$0x7]
        %v651 = vperm.slane %v649, 0
        %v652 = vperm.slane %v649, 1
        %v653 = vperm.slane %v649, 2
        %657 = vmatpush.msra.mxu0 %v646
        %658 = vmatpush.msra.mxu0 %v643
        %659 = vmatpush.msra.mxu0 %v640
        %660 = vmatpush.msra.mxu0 %v637
        %661 = vmatpush.msra.mxu0 %v634
        %662 = vmatpush.msra.mxu0 %v631
        %663 = vmatpush.msra.mxu0 %v628
        %664 = vmatpush.msra.mxu0 %v625
        %665 = vmatpush.msra.mxu0 %v622
        %666 = vmatpush.msra.mxu0 %v619
        %667 = vmatpush.msra.mxu0 %v616
        %668 = vmatpush.msra.mxu0 %v613
        %669 = vmatpush.msra.mxu0 %v610
        %670 = vmatpush.msra.mxu0 %v607
        %671 = vmatpush.msra.mxu0 %v604
        %672 = vmatpush.msra.mxu0 %v601
        %673 = vmatmul.f32.gmra.mxu0 %v600
        %v674 = vpop.f32.mrf.mxu0
        %v675 = vadd.f32 %v651, %v674
        %676 = vdwg.mxu0
        %677 = vmatpush.msra.mxu0 %v647
        %678 = vmatpush.msra.mxu0 %v644
        %679 = vmatpush.msra.mxu0 %v641
        %680 = vmatpush.msra.mxu0 %v638
        %681 = vmatpush.msra.mxu0 %v635
        %682 = vmatpush.msra.mxu0 %v632
        %683 = vmatpush.msra.mxu0 %v629
        %684 = vmatpush.msra.mxu0 %v626
        %685 = vmatpush.msra.mxu0 %v623
        %686 = vmatpush.msra.mxu0 %v620
        %687 = vmatpush.msra.mxu0 %v617
        %688 = vmatpush.msra.mxu0 %v614
        %689 = vmatpush.msra.mxu0 %v611
        %690 = vmatpush.msra.mxu0 %v608
        %691 = vmatpush.msra.mxu0 %v605
        %692 = vmatpush.msra.mxu0 %v602
        %693 = vmatmul.f32.gmra.mxu0 %v600
        %v694 = vpop.f32.mrf.mxu0
        %v695 = vadd.f32 %v652, %v694
        %696 = vdwg.mxu0
        %697 = vmatpush.msra.mxu0 %v648
        %698 = vmatpush.msra.mxu0 %v645
        %699 = vmatpush.msra.mxu0 %v642
        %700 = vmatpush.msra.mxu0 %v639
        %701 = vmatpush.msra.mxu0 %v636
        %702 = vmatpush.msra.mxu0 %v633
        %703 = vmatpush.msra.mxu0 %v630
        %704 = vmatpush.msra.mxu0 %v627
        %705 = vmatpush.msra.mxu0 %v624
        %706 = vmatpush.msra.mxu0 %v621
        %707 = vmatpush.msra.mxu0 %v618
        %708 = vmatpush.msra.mxu0 %v615
        %709 = vmatpush.msra.mxu0 %v612
        %710 = vmatpush.msra.mxu0 %v609
        %711 = vmatpush.msra.mxu0 %v606
        %712 = vmatpush.msra.mxu0 %v603
        %713 = vmatmul.f32.gmra.mxu0 %v600
        %v714 = vpop.f32.mrf.mxu0
        %v715 = vadd.f32 %v653, %v714
        %716 = vdwg.mxu0
        %718 = vrot.lane.b32.xlu0 %v675, 96
        %v719 = vpop.permute.xlu0 %718
        %720 = vrot.lane.b32.xlu0 %v675, 64
        %v721 = vpop.permute.xlu0 %720
        %722 = vrot.lane.b32.xlu0 %v675, 32
        %v723 = vpop.permute.xlu0 %722
        %725 = vrot.lane.b32.xlu0 %v695, 96
        %v726 = vpop.permute.xlu0 %725
        %728 = vrot.lane.b32.xlu0 %v695, 64
        %v729 = vpop.permute.xlu0 %728
        %731 = vrot.lane.b32.xlu0 %v695, 32
        %v732 = vpop.permute.xlu0 %731
        %735 = vrot.lane.b32.xlu0 %v715, 96
        %v736 = vpop.permute.xlu0 %735
        %738 = vrot.lane.b32.xlu0 %v715, 64
        %v739 = vpop.permute.xlu0 %738
        %741 = vrot.lane.b32.xlu0 %v715, 32
        %v742 = vpop.permute.xlu0 %741
        %744 = vxpose.xlu0.b32.start [1/16] %v695, 128
        %745 = vxpose.xlu0.b32.cont [2/16] 0.0, 128
        %746 = vxpose.xlu0.b32.cont [3/16] 0.0, 128
        %747 = vxpose.xlu0.b32.cont [4/16] 0.0, 128
        %748 = vxpose.xlu0.b32.cont [5/16] 0.0, 128
        %749 = vxpose.xlu0.b32.cont [6/16] 0.0, 128
        %750 = vxpose.xlu0.b32.cont [7/16] 0.0, 128
        %751 = vxpose.xlu0.b32.cont [8/16] 0.0, 128
        %752 = vxpose.xlu0.b32.cont [9/16] 0.0, 128
        %753 = vxpose.xlu0.b32.cont [10/16] 0.0, 128
        %754 = vxpose.xlu0.b32.cont [11/16] 0.0, 128
        %755 = vxpose.xlu0.b32.cont [12/16] 0.0, 128
        %756 = vxpose.xlu0.b32.cont [13/16] 0.0, 128
        %757 = vxpose.xlu0.b32.cont [14/16] 0.0, 128
        %758 = vxpose.xlu0.b32.cont [15/16] 0.0, 128
        %759 = vxpose.xlu0.b32.end [16/16] 0.0, 128
        %v760 = vpop.trf.xlu0
        %v761 = vpop.trf.xlu0
        %v762 = vpop.trf.xlu0
        %v763 = vpop.trf.xlu0
        %v764 = vpop.trf.xlu0
        %v765 = vpop.trf.xlu0
        %v766 = vpop.trf.xlu0
        %v767 = vpop.trf.xlu0
        %v768 = vpop.trf.xlu0
        %v769 = vpop.trf.xlu0
        %v770 = vpop.trf.xlu0
        %v771 = vpop.trf.xlu0
        %v772 = vpop.trf.xlu0
        %v773 = vpop.trf.xlu0
        %v774 = vpop.trf.xlu0
        %v775 = vpop.trf.xlu0
        %776 = vxpose.xlu0.b32.start [1/16] %v726, 128
        %777 = vxpose.xlu0.b32.cont [2/16] 0.0, 128
        %778 = vxpose.xlu0.b32.cont [3/16] 0.0, 128
        %779 = vxpose.xlu0.b32.cont [4/16] 0.0, 128
        %780 = vxpose.xlu0.b32.cont [5/16] 0.0, 128
        %781 = vxpose.xlu0.b32.cont [6/16] 0.0, 128
        %782 = vxpose.xlu0.b32.cont [7/16] 0.0, 128
        %783 = vxpose.xlu0.b32.cont [8/16] 0.0, 128
        %784 = vxpose.xlu0.b32.cont [9/16] 0.0, 128
        %785 = vxpose.xlu0.b32.cont [10/16] 0.0, 128
        %786 = vxpose.xlu0.b32.cont [11/16] 0.0, 128
        %787 = vxpose.xlu0.b32.cont [12/16] 0.0, 128
        %788 = vxpose.xlu0.b32.cont [13/16] 0.0, 128
        %789 = vxpose.xlu0.b32.cont [14/16] 0.0, 128
        %790 = vxpose.xlu0.b32.cont [15/16] 0.0, 128
        %791 = vxpose.xlu0.b32.end [16/16] 0.0, 128
        %v792 = vpop.trf.xlu0
        %v793 = vpop.trf.xlu0
        %v794 = vpop.trf.xlu0
        %v795 = vpop.trf.xlu0
        %v796 = vpop.trf.xlu0
        %v797 = vpop.trf.xlu0
        %v798 = vpop.trf.xlu0
        %v799 = vpop.trf.xlu0
        %v800 = vpop.trf.xlu0
        %v801 = vpop.trf.xlu0
        %v802 = vpop.trf.xlu0
        %v803 = vpop.trf.xlu0
        %v804 = vpop.trf.xlu0
        %v805 = vpop.trf.xlu0
        %v806 = vpop.trf.xlu0
        %v807 = vpop.trf.xlu0
        %808 = vxpose.xlu0.b32.start [1/16] %v729, 128
        %809 = vxpose.xlu0.b32.cont [2/16] 0.0, 128
        %810 = vxpose.xlu0.b32.cont [3/16] 0.0, 128
        %811 = vxpose.xlu0.b32.cont [4/16] 0.0, 128
        %812 = vxpose.xlu0.b32.cont [5/16] 0.0, 128
        %813 = vxpose.xlu0.b32.cont [6/16] 0.0, 128
        %814 = vxpose.xlu0.b32.cont [7/16] 0.0, 128
        %815 = vxpose.xlu0.b32.cont [8/16] 0.0, 128
        %816 = vxpose.xlu0.b32.cont [9/16] 0.0, 128
        %817 = vxpose.xlu0.b32.cont [10/16] 0.0, 128
        %818 = vxpose.xlu0.b32.cont [11/16] 0.0, 128
        %819 = vxpose.xlu0.b32.cont [12/16] 0.0, 128
        %820 = vxpose.xlu0.b32.cont [13/16] 0.0, 128
        %821 = vxpose.xlu0.b32.cont [14/16] 0.0, 128
        %822 = vxpose.xlu0.b32.cont [15/16] 0.0, 128
        %823 = vxpose.xlu0.b32.end [16/16] 0.0, 128
        %v824 = vpop.trf.xlu0
        %v825 = vpop.trf.xlu0
        %v826 = vpop.trf.xlu0
        %v827 = vpop.trf.xlu0
        %v828 = vpop.trf.xlu0
        %v829 = vpop.trf.xlu0
        %v830 = vpop.trf.xlu0
        %v831 = vpop.trf.xlu0
        %v832 = vpop.trf.xlu0
        %v833 = vpop.trf.xlu0
        %v834 = vpop.trf.xlu0
        %v835 = vpop.trf.xlu0
        %v836 = vpop.trf.xlu0
        %v837 = vpop.trf.xlu0
        %v838 = vpop.trf.xlu0
        %v839 = vpop.trf.xlu0
        %840 = vxpose.xlu0.b32.start [1/16] %v732, 128
        %841 = vxpose.xlu0.b32.cont [2/16] 0.0, 128
        %842 = vxpose.xlu0.b32.cont [3/16] 0.0, 128
        %843 = vxpose.xlu0.b32.cont [4/16] 0.0, 128
        %844 = vxpose.xlu0.b32.cont [5/16] 0.0, 128
        %845 = vxpose.xlu0.b32.cont [6/16] 0.0, 128
        %846 = vxpose.xlu0.b32.cont [7/16] 0.0, 128
        %847 = vxpose.xlu0.b32.cont [8/16] 0.0, 128
        %848 = vxpose.xlu0.b32.cont [9/16] 0.0, 128
        %849 = vxpose.xlu0.b32.cont [10/16] 0.0, 128
        %850 = vxpose.xlu0.b32.cont [11/16] 0.0, 128
        %851 = vxpose.xlu0.b32.cont [12/16] 0.0, 128
        %852 = vxpose.xlu0.b32.cont [13/16] 0.0, 128
        %853 = vxpose.xlu0.b32.cont [14/16] 0.0, 128
        %854 = vxpose.xlu0.b32.cont [15/16] 0.0, 128
        %855 = vxpose.xlu0.b32.end [16/16] 0.0, 128
        %v856 = vpop.trf.xlu0
        %v857 = vpop.trf.xlu0
        %v858 = vpop.trf.xlu0
        %v859 = vpop.trf.xlu0
        %v860 = vpop.trf.xlu0
        %v861 = vpop.trf.xlu0
        %v862 = vpop.trf.xlu0
        %v863 = vpop.trf.xlu0
        %v864 = vpop.trf.xlu0
        %v865 = vpop.trf.xlu0
        %v866 = vpop.trf.xlu0
        %v867 = vpop.trf.xlu0
        %v868 = vpop.trf.xlu0
        %v869 = vpop.trf.xlu0
        %v870 = vpop.trf.xlu0
        %v871 = vpop.trf.xlu0
        %vm872 = vcmask 261120
        %v873 = vsel %vm872, %v675, 0
        %875 = vmatpush.msra.mxu0 0.0
        %876 = vmatpush.msra.mxu0 0.0
        %877 = vmatpush.msra.mxu0 0.0
        %878 = vmatpush.msra.mxu0 0.0
        %879 = vmatpush.msra.mxu0 0.0
        %880 = vmatpush.msra.mxu0 0.0
        %881 = vmatpush.msra.mxu0 0.0
        %882 = vmatpush.msra.mxu0 0.0
        %883 = vmatpush.msra.mxu0 0.0
        %884 = vmatpush.msra.mxu0 0.0
        %885 = vmatpush.msra.mxu0 0.0
        %886 = vmatpush.msra.mxu0 0.0
        %887 = vmatpush.msra.mxu0 %v763
        %888 = vmatpush.msra.mxu0 %v762
        %889 = vmatpush.msra.mxu0 %v761
        %890 = vmatpush.msra.mxu0 %v760
        %891 = vmatmul.f32.gmra.mxu0 %v873
        %v892 = vpop.f32.mrf.mxu0
        %v893 = vadd.f32 0.0, %v892
        %894 = vdwg.mxu0
        %v895 = vsel %vm872, %v719, 0
        %897 = vmatpush.msra.mxu0 0.0
        %898 = vmatpush.msra.mxu0 0.0
        %899 = vmatpush.msra.mxu0 0.0
        %900 = vmatpush.msra.mxu0 0.0
        %901 = vmatpush.msra.mxu0 0.0
        %902 = vmatpush.msra.mxu0 0.0
        %903 = vmatpush.msra.mxu0 0.0
        %904 = vmatpush.msra.mxu0 0.0
        %905 = vmatpush.msra.mxu0 0.0
        %906 = vmatpush.msra.mxu0 0.0
        %907 = vmatpush.msra.mxu0 0.0
        %908 = vmatpush.msra.mxu0 0.0
        %909 = vmatpush.msra.mxu0 %v795
        %910 = vmatpush.msra.mxu0 %v794
        %911 = vmatpush.msra.mxu0 %v793
        %912 = vmatpush.msra.mxu0 %v792
        %913 = vmatmul.f32.gmra.mxu0 %v895
        %v914 = vpop.f32.mrf.mxu0
        %v915 = vadd.f32 0.0, %v914
        %916 = vdwg.mxu0
        %v917 = vsel %vm872, %v721, 0
        %919 = vmatpush.msra.mxu0 0.0
        %920 = vmatpush.msra.mxu0 0.0
        %921 = vmatpush.msra.mxu0 0.0
        %922 = vmatpush.msra.mxu0 0.0
        %923 = vmatpush.msra.mxu0 0.0
        %924 = vmatpush.msra.mxu0 0.0
        %925 = vmatpush.msra.mxu0 0.0
        %926 = vmatpush.msra.mxu0 0.0
        %927 = vmatpush.msra.mxu0 0.0
        %928 = vmatpush.msra.mxu0 0.0
        %929 = vmatpush.msra.mxu0 0.0
        %930 = vmatpush.msra.mxu0 0.0
        %931 = vmatpush.msra.mxu0 %v827
        %932 = vmatpush.msra.mxu0 %v826
        %933 = vmatpush.msra.mxu0 %v825
        %934 = vmatpush.msra.mxu0 %v824
        %935 = vmatmul.f32.gmra.mxu0 %v917
        %v936 = vpop.f32.mrf.mxu0
        %v937 = vadd.f32 0.0, %v936
        %938 = vdwg.mxu0
        %v939 = vsel %vm872, %v723, 0
        %941 = vmatpush.msra.mxu0 0.0
        %942 = vmatpush.msra.mxu0 0.0
        %943 = vmatpush.msra.mxu0 0.0
        %944 = vmatpush.msra.mxu0 0.0
        %945 = vmatpush.msra.mxu0 0.0
        %946 = vmatpush.msra.mxu0 0.0
        %947 = vmatpush.msra.mxu0 0.0
        %948 = vmatpush.msra.mxu0 0.0
        %949 = vmatpush.msra.mxu0 0.0
        %950 = vmatpush.msra.mxu0 0.0
        %951 = vmatpush.msra.mxu0 0.0
        %952 = vmatpush.msra.mxu0 0.0
        %953 = vmatpush.msra.mxu0 %v859
        %954 = vmatpush.msra.mxu0 %v858
        %955 = vmatpush.msra.mxu0 %v857
        %956 = vmatpush.msra.mxu0 %v856
        %957 = vmatmul.f32.gmra.mxu0 %v939
        %v958 = vpop.f32.mrf.mxu0
        %v959 = vadd.f32 0.0, %v958
        %960 = vdwg.mxu0
        %v961 = vld [vmem:[%s525] sm:$0x1]
        %vm962 = vcmp.eq.s32.totalorder %v961, 0
        %v963 = vsel %vm962, 1, 0
        %v964 = vperm.slane %v963, 0
        %vm965 = vcmp.eq.s32.totalorder %v964, 1
        %v966 = vsel %vm965, -inf, %v893
        %v967 = vsel %vm965, -inf, %v915
        %v968 = vsel %vm965, -inf, %v937
        %v969 = vsel %vm965, -inf, %v959
        %vm970 = vcmask 64512
        %v971 = vsel %vm970, %v966, -inf
        %972 = vmax.xlane.f32.xlu0 %v971
        %v973 = vpop.xlane.xlu0 %972
        %v974 = vsel %vm970, %v967, -inf
        %975 = vmax.xlane.f32.xlu0 %v974
        %v976 = vpop.xlane.xlu0 %975
        %v977 = vsel %vm970, %v968, -inf
        %978 = vmax.xlane.f32.xlu0 %v977
        %v979 = vpop.xlane.xlu0 %978
        %v980 = vsel %vm970, %v969, -inf
        %981 = vmax.xlane.f32.xlu0 %v980
        %v982 = vpop.xlane.xlu0 %981
        %v983 = vsub.f32 %v966, %v973
        %v984 = vsub.f32 %v967, %v976
        %v985 = vsub.f32 %v968, %v979
        %v986 = vsub.f32 %v969, %v982
        %v987 = vmul.f32 %v983, 1.442695
        %v988 = vpow.pop %v987
        %v989 = vmul.f32 %v984, 1.442695
        %v990 = vpow.pop %v989
        %v991 = vmul.f32 %v985, 1.442695
        %v992 = vpow.pop %v991
        %v993 = vmul.f32 %v986, 1.442695
        %v994 = vpow.pop %v993
        %v995 = vsel %vm970, %v988, 0.0
        %996 = vadd.xlane.f32.xlu0 %v995
        %v997 = vpop.xlane.xlu0 %996
        %v998 = vsel %vm970, %v990, 0.0
        %999 = vadd.xlane.f32.xlu0 %v998
        %v1000 = vpop.xlane.xlu0 %999
        %v1001 = vsel %vm970, %v992, 0.0
        %1002 = vadd.xlane.f32.xlu0 %v1001
        %v1003 = vpop.xlane.xlu0 %1002
        %v1004 = vsel %vm970, %v994, 0.0
        %1005 = vadd.xlane.f32.xlu0 %v1004
        %v1006 = vpop.xlane.xlu0 %1005
        %v1007 = vrcp.pop %v997
        %v1008 = vrcp.pop %v1000
        %v1009 = vrcp.pop %v1003
        %v1010 = vrcp.pop %v1006
        %v1011 = vmul.f32 %v988, %v1007
        %v1012 = vmul.f32 %v990, %v1008
        %v1013 = vmul.f32 %v992, %v1009
        %v1014 = vmul.f32 %v994, %v1010
        %1015 = vxpose.xlu0.b32.start [1/16] %v715, 128
        %1016 = vxpose.xlu0.b32.cont [2/16] 0.0, 128
        %1017 = vxpose.xlu0.b32.cont [3/16] 0.0, 128
        %1018 = vxpose.xlu0.b32.cont [4/16] 0.0, 128
        %1019 = vxpose.xlu0.b32.cont [5/16] 0.0, 128
        %1020 = vxpose.xlu0.b32.cont [6/16] 0.0, 128
        %1021 = vxpose.xlu0.b32.cont [7/16] 0.0, 128
        %1022 = vxpose.xlu0.b32.cont [8/16] 0.0, 128
        %1023 = vxpose.xlu0.b32.cont [9/16] 0.0, 128
        %1024 = vxpose.xlu0.b32.cont [10/16] 0.0, 128
        %1025 = vxpose.xlu0.b32.cont [11/16] 0.0, 128
        %1026 = vxpose.xlu0.b32.cont [12/16] 0.0, 128
        %1027 = vxpose.xlu0.b32.cont [13/16] 0.0, 128
        %1028 = vxpose.xlu0.b32.cont [14/16] 0.0, 128
        %1029 = vxpose.xlu0.b32.cont [15/16] 0.0, 128
        %1030 = vxpose.xlu0.b32.end [16/16] 0.0, 128
        %v1031 = vpop.trf.xlu0
        %v1032 = vpop.trf.xlu0
        %v1033 = vpop.trf.xlu0
        %v1034 = vpop.trf.xlu0
        %v1035 = vpop.trf.xlu0
        %v1036 = vpop.trf.xlu0
        %v1037 = vpop.trf.xlu0
        %v1038 = vpop.trf.xlu0
        %v1039 = vpop.trf.xlu0
        %v1040 = vpop.trf.xlu0
        %v1041 = vpop.trf.xlu0
        %v1042 = vpop.trf.xlu0
        %v1043 = vpop.trf.xlu0
        %v1044 = vpop.trf.xlu0
        %v1045 = vpop.trf.xlu0
        %v1046 = vpop.trf.xlu0
        %1047 = vxpose.xlu0.b32.start [1/16] %v736, 128
        %1048 = vxpose.xlu0.b32.cont [2/16] 0.0, 128
        %1049 = vxpose.xlu0.b32.cont [3/16] 0.0, 128
        %1050 = vxpose.xlu0.b32.cont [4/16] 0.0, 128
        %1051 = vxpose.xlu0.b32.cont [5/16] 0.0, 128
        %1052 = vxpose.xlu0.b32.cont [6/16] 0.0, 128
        %1053 = vxpose.xlu0.b32.cont [7/16] 0.0, 128
        %1054 = vxpose.xlu0.b32.cont [8/16] 0.0, 128
        %1055 = vxpose.xlu0.b32.cont [9/16] 0.0, 128
        %1056 = vxpose.xlu0.b32.cont [10/16] 0.0, 128
        %1057 = vxpose.xlu0.b32.cont [11/16] 0.0, 128
        %1058 = vxpose.xlu0.b32.cont [12/16] 0.0, 128
        %1059 = vxpose.xlu0.b32.cont [13/16] 0.0, 128
        %1060 = vxpose.xlu0.b32.cont [14/16] 0.0, 128
        %1061 = vxpose.xlu0.b32.cont [15/16] 0.0, 128
        %1062 = vxpose.xlu0.b32.end [16/16] 0.0, 128
        %v1063 = vpop.trf.xlu0
        %v1064 = vpop.trf.xlu0
        %v1065 = vpop.trf.xlu0
        %v1066 = vpop.trf.xlu0
        %v1067 = vpop.trf.xlu0
        %v1068 = vpop.trf.xlu0
        %v1069 = vpop.trf.xlu0
        %v1070 = vpop.trf.xlu0
        %v1071 = vpop.trf.xlu0
        %v1072 = vpop.trf.xlu0
        %v1073 = vpop.trf.xlu0
        %v1074 = vpop.trf.xlu0
        %v1075 = vpop.trf.xlu0
        %v1076 = vpop.trf.xlu0
        %v1077 = vpop.trf.xlu0
        %v1078 = vpop.trf.xlu0
        %1079 = vxpose.xlu0.b32.start [1/16] %v739, 128
        %1080 = vxpose.xlu0.b32.cont [2/16] 0.0, 128
        %1081 = vxpose.xlu0.b32.cont [3/16] 0.0, 128
        %1082 = vxpose.xlu0.b32.cont [4/16] 0.0, 128
        %1083 = vxpose.xlu0.b32.cont [5/16] 0.0, 128
        %1084 = vxpose.xlu0.b32.cont [6/16] 0.0, 128
        %1085 = vxpose.xlu0.b32.cont [7/16] 0.0, 128
        %1086 = vxpose.xlu0.b32.cont [8/16] 0.0, 128
        %1087 = vxpose.xlu0.b32.cont [9/16] 0.0, 128
        %1088 = vxpose.xlu0.b32.cont [10/16] 0.0, 128
        %1089 = vxpose.xlu0.b32.cont [11/16] 0.0, 128
        %1090 = vxpose.xlu0.b32.cont [12/16] 0.0, 128
        %1091 = vxpose.xlu0.b32.cont [13/16] 0.0, 128
        %1092 = vxpose.xlu0.b32.cont [14/16] 0.0, 128
        %1093 = vxpose.xlu0.b32.cont [15/16] 0.0, 128
        %1094 = vxpose.xlu0.b32.end [16/16] 0.0, 128
        %v1095 = vpop.trf.xlu0
        %v1096 = vpop.trf.xlu0
        %v1097 = vpop.trf.xlu0
        %v1098 = vpop.trf.xlu0
        %v1099 = vpop.trf.xlu0
        %v1100 = vpop.trf.xlu0
        %v1101 = vpop.trf.xlu0
        %v1102 = vpop.trf.xlu0
        %v1103 = vpop.trf.xlu0
        %v1104 = vpop.trf.xlu0
        %v1105 = vpop.trf.xlu0
        %v1106 = vpop.trf.xlu0
        %v1107 = vpop.trf.xlu0
        %v1108 = vpop.trf.xlu0
        %v1109 = vpop.trf.xlu0
        %v1110 = vpop.trf.xlu0
        %1111 = vxpose.xlu0.b32.start [1/16] %v742, 128
        %1112 = vxpose.xlu0.b32.cont [2/16] 0.0, 128
        %1113 = vxpose.xlu0.b32.cont [3/16] 0.0, 128
        %1114 = vxpose.xlu0.b32.cont [4/16] 0.0, 128
        %1115 = vxpose.xlu0.b32.cont [5/16] 0.0, 128
        %1116 = vxpose.xlu0.b32.cont [6/16] 0.0, 128
        %1117 = vxpose.xlu0.b32.cont [7/16] 0.0, 128
        %1118 = vxpose.xlu0.b32.cont [8/16] 0.0, 128
        %1119 = vxpose.xlu0.b32.cont [9/16] 0.0, 128
        %1120 = vxpose.xlu0.b32.cont [10/16] 0.0, 128
        %1121 = vxpose.xlu0.b32.cont [11/16] 0.0, 128
        %1122 = vxpose.xlu0.b32.cont [12/16] 0.0, 128
        %1123 = vxpose.xlu0.b32.cont [13/16] 0.0, 128
        %1124 = vxpose.xlu0.b32.cont [14/16] 0.0, 128
        %1125 = vxpose.xlu0.b32.cont [15/16] 0.0, 128
        %1126 = vxpose.xlu0.b32.end [16/16] 0.0, 128
        %v1127 = vpop.trf.xlu0
        %v1128 = vpop.trf.xlu0
        %v1129 = vpop.trf.xlu0
        %v1130 = vpop.trf.xlu0
        %v1131 = vpop.trf.xlu0
        %v1132 = vpop.trf.xlu0
        %v1133 = vpop.trf.xlu0
        %v1134 = vpop.trf.xlu0
        %v1135 = vpop.trf.xlu0
        %v1136 = vpop.trf.xlu0
        %v1137 = vpop.trf.xlu0
        %v1138 = vpop.trf.xlu0
        %v1139 = vpop.trf.xlu0
        %v1140 = vpop.trf.xlu0
        %v1141 = vpop.trf.xlu0
        %v1142 = vpop.trf.xlu0
        %v1144 = vsel %vm970, %v1031, 0
        %v1147 = vsel %vm970, %v1032, 0
        %v1150 = vsel %vm970, %v1033, 0
        %v1153 = vsel %vm970, %v1034, 0
        %v1156 = vsel %vm970, %v1011, 0
        %1158 = vmatpush.xpose.msra.mxu0 0.0
        %1159 = vmatpush.xpose.msra.mxu0 0.0
        %1160 = vmatpush.xpose.msra.mxu0 0.0
        %1161 = vmatpush.xpose.msra.mxu0 0.0
        %1162 = vmatpush.xpose.msra.mxu0 0.0
        %1163 = vmatpush.xpose.msra.mxu0 0.0
        %1164 = vmatpush.xpose.msra.mxu0 0.0
        %1165 = vmatpush.xpose.msra.mxu0 0.0
        %1166 = vmatpush.xpose.msra.mxu0 0.0
        %1167 = vmatpush.xpose.msra.mxu0 0.0
        %1168 = vmatpush.xpose.msra.mxu0 0.0
        %1169 = vmatpush.xpose.msra.mxu0 0.0
        %1170 = vmatpush.xpose.msra.mxu0 0.0
        %1171 = vmatpush.xpose.msra.mxu0 0.0
        %1172 = vmatpush.xpose.msra.mxu0 0.0
        %1173 = vmatpush.xpose.msra.mxu0 %v1156
        %1174 = vmatmul.f32.gmra.mxu0 %v1144
        %v1175 = vpop.f32.mrf.mxu0
        %v1176 = vadd.f32 0.0, %v1175
        %1177 = vmatmul.f32.gmra.mxu0 %v1147
        %v1178 = vpop.f32.mrf.mxu0
        %v1179 = vadd.f32 0.0, %v1178
        %1180 = vmatmul.f32.gmra.mxu0 %v1150
        %v1181 = vpop.f32.mrf.mxu0
        %v1182 = vadd.f32 0.0, %v1181
        %1183 = vmatmul.f32.gmra.mxu0 %v1153
        %v1184 = vpop.f32.mrf.mxu0
        %v1185 = vadd.f32 0.0, %v1184
        %1186 = vdwg.mxu0
        %v1188 = vsel %vm970, %v1063, 0
        %v1191 = vsel %vm970, %v1064, 0
        %v1194 = vsel %vm970, %v1065, 0
        %v1197 = vsel %vm970, %v1066, 0
        %v1200 = vsel %vm970, %v1012, 0
        %1202 = vmatpush.xpose.msra.mxu0 0.0
        %1203 = vmatpush.xpose.msra.mxu0 0.0
        %1204 = vmatpush.xpose.msra.mxu0 0.0
        %1205 = vmatpush.xpose.msra.mxu0 0.0
        %1206 = vmatpush.xpose.msra.mxu0 0.0
        %1207 = vmatpush.xpose.msra.mxu0 0.0
        %1208 = vmatpush.xpose.msra.mxu0 0.0
        %1209 = vmatpush.xpose.msra.mxu0 0.0
        %1210 = vmatpush.xpose.msra.mxu0 0.0
        %1211 = vmatpush.xpose.msra.mxu0 0.0
        %1212 = vmatpush.xpose.msra.mxu0 0.0
        %1213 = vmatpush.xpose.msra.mxu0 0.0
        %1214 = vmatpush.xpose.msra.mxu0 0.0
        %1215 = vmatpush.xpose.msra.mxu0 0.0
        %1216 = vmatpush.xpose.msra.mxu0 0.0
        %1217 = vmatpush.xpose.msra.mxu0 %v1200
        %1218 = vmatmul.f32.gmra.mxu0 %v1188
        %v1219 = vpop.f32.mrf.mxu0
        %v1220 = vadd.f32 0.0, %v1219
        %1221 = vmatmul.f32.gmra.mxu0 %v1191
        %v1222 = vpop.f32.mrf.mxu0
        %v1223 = vadd.f32 0.0, %v1222
        %1224 = vmatmul.f32.gmra.mxu0 %v1194
        %v1225 = vpop.f32.mrf.mxu0
        %v1226 = vadd.f32 0.0, %v1225
        %1227 = vmatmul.f32.gmra.mxu0 %v1197
        %v1228 = vpop.f32.mrf.mxu0
        %v1229 = vadd.f32 0.0, %v1228
        %1230 = vdwg.mxu0
        %v1232 = vsel %vm970, %v1095, 0
        %v1235 = vsel %vm970, %v1096, 0
        %v1238 = vsel %vm970, %v1097, 0
        %v1241 = vsel %vm970, %v1098, 0
        %v1244 = vsel %vm970, %v1013, 0
        %1246 = vmatpush.xpose.msra.mxu0 0.0
        %1247 = vmatpush.xpose.msra.mxu0 0.0
        %1248 = vmatpush.xpose.msra.mxu0 0.0
        %1249 = vmatpush.xpose.msra.mxu0 0.0
        %1250 = vmatpush.xpose.msra.mxu0 0.0
        %1251 = vmatpush.xpose.msra.mxu0 0.0
        %1252 = vmatpush.xpose.msra.mxu0 0.0
        %1253 = vmatpush.xpose.msra.mxu0 0.0
        %1254 = vmatpush.xpose.msra.mxu0 0.0
        %1255 = vmatpush.xpose.msra.mxu0 0.0
        %1256 = vmatpush.xpose.msra.mxu0 0.0
        %1257 = vmatpush.xpose.msra.mxu0 0.0
        %1258 = vmatpush.xpose.msra.mxu0 0.0
        %1259 = vmatpush.xpose.msra.mxu0 0.0
        %1260 = vmatpush.xpose.msra.mxu0 0.0
        %1261 = vmatpush.xpose.msra.mxu0 %v1244
        %1262 = vmatmul.f32.gmra.mxu0 %v1232
        %v1263 = vpop.f32.mrf.mxu0
        %v1264 = vadd.f32 0.0, %v1263
        %1265 = vmatmul.f32.gmra.mxu0 %v1235
        %v1266 = vpop.f32.mrf.mxu0
        %v1267 = vadd.f32 0.0, %v1266
        %1268 = vmatmul.f32.gmra.mxu0 %v1238
        %v1269 = vpop.f32.mrf.mxu0
        %v1270 = vadd.f32 0.0, %v1269
        %1271 = vmatmul.f32.gmra.mxu0 %v1241
        %v1272 = vpop.f32.mrf.mxu0
        %v1273 = vadd.f32 0.0, %v1272
        %1274 = vdwg.mxu0
        %v1276 = vsel %vm970, %v1127, 0
        %v1279 = vsel %vm970, %v1128, 0
        %v1282 = vsel %vm970, %v1129, 0
        %v1285 = vsel %vm970, %v1130, 0
        %v1288 = vsel %vm970, %v1014, 0
        %1290 = vmatpush.xpose.msra.mxu0 0.0
        %1291 = vmatpush.xpose.msra.mxu0 0.0
        %1292 = vmatpush.xpose.msra.mxu0 0.0
        %1293 = vmatpush.xpose.msra.mxu0 0.0
        %1294 = vmatpush.xpose.msra.mxu0 0.0
        %1295 = vmatpush.xpose.msra.mxu0 0.0
        %1296 = vmatpush.xpose.msra.mxu0 0.0
        %1297 = vmatpush.xpose.msra.mxu0 0.0
        %1298 = vmatpush.xpose.msra.mxu0 0.0
        %1299 = vmatpush.xpose.msra.mxu0 0.0
        %1300 = vmatpush.xpose.msra.mxu0 0.0
        %1301 = vmatpush.xpose.msra.mxu0 0.0
        %1302 = vmatpush.xpose.msra.mxu0 0.0
        %1303 = vmatpush.xpose.msra.mxu0 0.0
        %1304 = vmatpush.xpose.msra.mxu0 0.0
        %1305 = vmatpush.xpose.msra.mxu0 %v1288
        %1306 = vmatmul.f32.gmra.mxu0 %v1276
        %v1307 = vpop.f32.mrf.mxu0
        %v1308 = vadd.f32 0.0, %v1307
        %1309 = vmatmul.f32.gmra.mxu0 %v1279
        %v1310 = vpop.f32.mrf.mxu0
        %v1311 = vadd.f32 0.0, %v1310
        %1312 = vmatmul.f32.gmra.mxu0 %v1282
        %v1313 = vpop.f32.mrf.mxu0
        %v1314 = vadd.f32 0.0, %v1313
        %1315 = vmatmul.f32.gmra.mxu0 %v1285
        %v1316 = vpop.f32.mrf.mxu0
        %v1317 = vadd.f32 0.0, %v1316
        %1318 = vdwg.mxu0
        %1319 = vxpose.xlu0.b32.start [1/16] %v1176, 128
        %1320 = vxpose.xlu0.b32.cont [2/16] %v1179, 128
        %1321 = vxpose.xlu0.b32.cont [3/16] %v1182, 128
        %1322 = vxpose.xlu0.b32.cont [4/16] %v1185, 128
        %1323 = vxpose.xlu0.b32.cont [5/16] 0.0, 128
        %1324 = vxpose.xlu0.b32.cont [6/16] 0.0, 128
        %1325 = vxpose.xlu0.b32.cont [7/16] 0.0, 128
        %1326 = vxpose.xlu0.b32.cont [8/16] 0.0, 128
        %1327 = vxpose.xlu0.b32.cont [9/16] 0.0, 128
        %1328 = vxpose.xlu0.b32.cont [10/16] 0.0, 128
        %1329 = vxpose.xlu0.b32.cont [11/16] 0.0, 128
        %1330 = vxpose.xlu0.b32.cont [12/16] 0.0, 128
        %1331 = vxpose.xlu0.b32.cont [13/16] 0.0, 128
        %1332 = vxpose.xlu0.b32.cont [14/16] 0.0, 128
        %1333 = vxpose.xlu0.b32.cont [15/16] 0.0, 128
        %1334 = vxpose.xlu0.b32.end [16/16] 0.0, 128
        %v1335 = vpop.trf.xlu0
        %v1336 = vpop.trf.xlu0
        %v1337 = vpop.trf.xlu0
        %v1338 = vpop.trf.xlu0
        %v1339 = vpop.trf.xlu0
        %v1340 = vpop.trf.xlu0
        %v1341 = vpop.trf.xlu0
        %v1342 = vpop.trf.xlu0
        %v1343 = vpop.trf.xlu0
        %v1344 = vpop.trf.xlu0
        %v1345 = vpop.trf.xlu0
        %v1346 = vpop.trf.xlu0
        %v1347 = vpop.trf.xlu0
        %v1348 = vpop.trf.xlu0
        %v1349 = vpop.trf.xlu0
        %v1350 = vpop.trf.xlu0
        %1351 = vxpose.xlu0.b32.start [1/16] %v1220, 128
        %1352 = vxpose.xlu0.b32.cont [2/16] %v1223, 128
        %1353 = vxpose.xlu0.b32.cont [3/16] %v1226, 128
        %1354 = vxpose.xlu0.b32.cont [4/16] %v1229, 128
        %1355 = vxpose.xlu0.b32.cont [5/16] 0.0, 128
        %1356 = vxpose.xlu0.b32.cont [6/16] 0.0, 128
        %1357 = vxpose.xlu0.b32.cont [7/16] 0.0, 128
        %1358 = vxpose.xlu0.b32.cont [8/16] 0.0, 128
        %1359 = vxpose.xlu0.b32.cont [9/16] 0.0, 128
        %1360 = vxpose.xlu0.b32.cont [10/16] 0.0, 128
        %1361 = vxpose.xlu0.b32.cont [11/16] 0.0, 128
        %1362 = vxpose.xlu0.b32.cont [12/16] 0.0, 128
        %1363 = vxpose.xlu0.b32.cont [13/16] 0.0, 128
        %1364 = vxpose.xlu0.b32.cont [14/16] 0.0, 128
        %1365 = vxpose.xlu0.b32.cont [15/16] 0.0, 128
        %1366 = vxpose.xlu0.b32.end [16/16] 0.0, 128
        %v1367 = vpop.trf.xlu0
        %v1368 = vpop.trf.xlu0
        %v1369 = vpop.trf.xlu0
        %v1370 = vpop.trf.xlu0
        %v1371 = vpop.trf.xlu0
        %v1372 = vpop.trf.xlu0
        %v1373 = vpop.trf.xlu0
        %v1374 = vpop.trf.xlu0
        %v1375 = vpop.trf.xlu0
        %v1376 = vpop.trf.xlu0
        %v1377 = vpop.trf.xlu0
        %v1378 = vpop.trf.xlu0
        %v1379 = vpop.trf.xlu0
        %v1380 = vpop.trf.xlu0
        %v1381 = vpop.trf.xlu0
        %v1382 = vpop.trf.xlu0
        %1383 = vxpose.xlu0.b32.start [1/16] %v1264, 128
        %1384 = vxpose.xlu0.b32.cont [2/16] %v1267, 128
        %1385 = vxpose.xlu0.b32.cont [3/16] %v1270, 128
        %1386 = vxpose.xlu0.b32.cont [4/16] %v1273, 128
        %1387 = vxpose.xlu0.b32.cont [5/16] 0.0, 128
        %1388 = vxpose.xlu0.b32.cont [6/16] 0.0, 128
        %1389 = vxpose.xlu0.b32.cont [7/16] 0.0, 128
        %1390 = vxpose.xlu0.b32.cont [8/16] 0.0, 128
        %1391 = vxpose.xlu0.b32.cont [9/16] 0.0, 128
        %1392 = vxpose.xlu0.b32.cont [10/16] 0.0, 128
        %1393 = vxpose.xlu0.b32.cont [11/16] 0.0, 128
        %1394 = vxpose.xlu0.b32.cont [12/16] 0.0, 128
        %1395 = vxpose.xlu0.b32.cont [13/16] 0.0, 128
        %1396 = vxpose.xlu0.b32.cont [14/16] 0.0, 128
        %1397 = vxpose.xlu0.b32.cont [15/16] 0.0, 128
        %1398 = vxpose.xlu0.b32.end [16/16] 0.0, 128
        %v1399 = vpop.trf.xlu0
        %v1400 = vpop.trf.xlu0
        %v1401 = vpop.trf.xlu0
        %v1402 = vpop.trf.xlu0
        %v1403 = vpop.trf.xlu0
        %v1404 = vpop.trf.xlu0
        %v1405 = vpop.trf.xlu0
        %v1406 = vpop.trf.xlu0
        %v1407 = vpop.trf.xlu0
        %v1408 = vpop.trf.xlu0
        %v1409 = vpop.trf.xlu0
        %v1410 = vpop.trf.xlu0
        %v1411 = vpop.trf.xlu0
        %v1412 = vpop.trf.xlu0
        %v1413 = vpop.trf.xlu0
        %v1414 = vpop.trf.xlu0
        %1415 = vxpose.xlu0.b32.start [1/16] %v1308, 128
        %1416 = vxpose.xlu0.b32.cont [2/16] %v1311, 128
        %1417 = vxpose.xlu0.b32.cont [3/16] %v1314, 128
        %1418 = vxpose.xlu0.b32.cont [4/16] %v1317, 128
        %1419 = vxpose.xlu0.b32.cont [5/16] 0.0, 128
        %1420 = vxpose.xlu0.b32.cont [6/16] 0.0, 128
        %1421 = vxpose.xlu0.b32.cont [7/16] 0.0, 128
        %1422 = vxpose.xlu0.b32.cont [8/16] 0.0, 128
        %1423 = vxpose.xlu0.b32.cont [9/16] 0.0, 128
        %1424 = vxpose.xlu0.b32.cont [10/16] 0.0, 128
        %1425 = vxpose.xlu0.b32.cont [11/16] 0.0, 128
        %1426 = vxpose.xlu0.b32.cont [12/16] 0.0, 128
        %1427 = vxpose.xlu0.b32.cont [13/16] 0.0, 128
        %1428 = vxpose.xlu0.b32.cont [14/16] 0.0, 128
        %1429 = vxpose.xlu0.b32.cont [15/16] 0.0, 128
        %1430 = vxpose.xlu0.b32.end [16/16] 0.0, 128
        %v1431 = vpop.trf.xlu0
        %v1432 = vpop.trf.xlu0
        %v1433 = vpop.trf.xlu0
        %v1434 = vpop.trf.xlu0
        %v1435 = vpop.trf.xlu0
        %v1436 = vpop.trf.xlu0
        %v1437 = vpop.trf.xlu0
        %v1438 = vpop.trf.xlu0
        %v1439 = vpop.trf.xlu0
        %v1440 = vpop.trf.xlu0
        %v1441 = vpop.trf.xlu0
        %v1442 = vpop.trf.xlu0
        %v1443 = vpop.trf.xlu0
        %v1444 = vpop.trf.xlu0
        %v1445 = vpop.trf.xlu0
        %v1446 = vpop.trf.xlu0
        %v1447 = vrot.slane %v1399, 4
        %vm1448 = vcmask 1047556
        %v1449 = vsel %vm1448, %v1447, %v1335
        %v1450 = vrot.slane %v1335, 4
        %v1451 = vsel %vm1448, %v1399, %v1450
        %v1453 = vunpack.c.l.s4 1983009808
        %v1454 = vunpack.c.0.s8 %v1453
        %v1455 = vperm.slane %v1449, %v1454
        %v1457 = vunpack.c.l.s4 1983009808
        %v1458 = vunpack.c.0.s8 %v1457
        %v1459 = vperm.slane %v1451, %v1458
        %v1460 = vrot.slane %v1431, 4
        %v1461 = vsel %vm1448, %v1460, %v1367
        %v1462 = vrot.slane %v1367, 4
        %v1463 = vsel %vm1448, %v1431, %v1462
        %v1465 = vunpack.c.l.s4 1983009808
        %v1466 = vunpack.c.0.s8 %v1465
        %v1467 = vperm.slane %v1461, %v1466
        %v1469 = vunpack.c.l.s4 1983009808
        %v1470 = vunpack.c.0.s8 %v1469
        %v1471 = vperm.slane %v1463, %v1470
        %v1472 = vrot.slane %v1467, 4
        %v1473 = vsel %vm1448, %v1472, %v1455
        %v1474 = vrot.slane %v1455, 4
        %v1475 = vsel %vm1448, %v1467, %v1474
        %v1477 = vunpack.c.l.s4 1934713408
        %v1478 = vunpack.c.0.s8 %v1477
        %v1479 = vperm.slane %v1473, %v1478
        %v1481 = vunpack.c.l.s4 1934713408
        %v1482 = vunpack.c.0.s8 %v1481
        %v1483 = vperm.slane %v1475, %v1482
        %v1484 = vrot.slane %v1471, 4
        %v1485 = vsel %vm1448, %v1484, %v1459
        %v1486 = vrot.slane %v1459, 4
        %v1487 = vsel %vm1448, %v1471, %v1486
        %v1489 = vunpack.c.l.s4 1934713408
        %v1490 = vunpack.c.0.s8 %v1489
        %v1491 = vperm.slane %v1485, %v1490
        %v1493 = vunpack.c.l.s4 1934713408
        %v1494 = vunpack.c.0.s8 %v1493
        %v1495 = vperm.slane %v1487, %v1494
        %v1496 = vrot.slane %v1479, 4
        %v1497 = vsel %vm1448, 0.0, %v1496
        %v1498 = vrot.slane %v1483, 4
        %v1499 = vsel %vm1448, 0.0, %v1498
        %v1500 = vrot.slane %v1491, 4
        %v1501 = vsel %vm1448, 0.0, %v1500
        %v1502 = vrot.slane %v1495, 4
        %v1503 = vsel %vm1448, 0.0, %v1502
        %v1504 = vsel %vm1448, %v1498, %v1479
        %v1506 = vunpack.c.l.s4 1983009808
        %v1507 = vunpack.c.0.s8 %v1506
        %v1508 = vperm.slane %v1504, %v1507
        %v1509 = vrot.slane %v1499, 4
        %v1510 = vsel %vm1448, %v1509, %v1497
        %v1512 = vunpack.c.l.s4 1983009808
        %v1513 = vunpack.c.0.s8 %v1512
        %v1514 = vperm.slane %v1510, %v1513
        %v1515 = vsel %vm1448, %v1502, %v1491
        %v1517 = vunpack.c.l.s4 1983009808
        %v1518 = vunpack.c.0.s8 %v1517
        %v1519 = vperm.slane %v1515, %v1518
        %v1520 = vrot.slane %v1503, 4
        %v1521 = vsel %vm1448, %v1520, %v1501
        %v1523 = vunpack.c.l.s4 1983009808
        %v1524 = vunpack.c.0.s8 %v1523
        %v1525 = vperm.slane %v1521, %v1524
        %v1526 = vrot.slane %v1514, 4
        %v1527 = vsel %vm1448, %v1526, %v1508
        %v1528 = vrot.slane %v1508, 4
        %v1529 = vsel %vm1448, %v1514, %v1528
        %v1531 = vunpack.c.l.s4 1934713408
        %v1532 = vunpack.c.0.s8 %v1531
        %v1533 = vperm.slane %v1527, %v1532
        %v1535 = vunpack.c.l.s4 1934713408
        %v1536 = vunpack.c.0.s8 %v1535
        %v1537 = vperm.slane %v1529, %v1536
        %v1538 = vrot.slane %v1525, 4
        %v1539 = vsel %vm1448, %v1538, %v1519
        %v1540 = vrot.slane %v1519, 4
        %v1541 = vsel %vm1448, %v1525, %v1540
        %v1543 = vunpack.c.l.s4 1934713408
        %v1544 = vunpack.c.0.s8 %v1543
        %v1545 = vperm.slane %v1539, %v1544
        %v1547 = vunpack.c.l.s4 1934713408
        %v1548 = vunpack.c.0.s8 %v1547
        %v1549 = vperm.slane %v1541, %v1548
        %v1550 = vrot.slane %v1545, 4
        %v1551 = vsel %vm1448, %v1550, %v1533
        %v1552 = vrot.slane %v1533, 4
        %v1553 = vsel %vm1448, %v1545, %v1552
        %v1554 = vrot.slane %v1549, 4
        %v1555 = vsel %vm1448, %v1554, %v1537
        %v1556 = vrot.slane %v1537, 4
        %v1557 = vsel %vm1448, %v1549, %v1556
        %1559 = vrot.lane.b32.xlu0 %v1553, 32
        %v1560 = vpop.permute.xlu0 %1559
        %1563 = vrot.lane.b32.xlu0 %v1555, 64
        %v1564 = vpop.permute.xlu0 %1563
        %1567 = vrot.lane.b32.xlu0 %v1557, 96
        %v1568 = vpop.permute.xlu0 %1567
        %v1570 = vsel %vm872, %v1551, %v1560
        %vm1571 = vcmask 523264
        %v1572 = vsel %vm1571, %v1570, %v1564
        %vm1573 = vcmask 785408
        %v1574 = vsel %vm1573, %v1572, %v1568
        %v1575 = vld [vmem:[#allocation10] sm:$0xff]
        %v1576 = vld [vmem:[#allocation10 + $0x8] sm:$0xff]
        %v1577 = vld [vmem:[#allocation10 + $0x10] sm:$0xff]
        %v1578 = vld [vmem:[#allocation10 + $0x18] sm:$0xff]
        %v1579 = vld [vmem:[#allocation10 + $0x20] sm:$0xff]
        %v1580 = vld [vmem:[#allocation10 + $0x28] sm:$0xff]
        %v1581 = vld [vmem:[#allocation10 + $0x30] sm:$0xff]
        %v1582 = vld [vmem:[#allocation10 + $0x38] sm:$0xff]
        %v1583 = vld [vmem:[#allocation10 + $0x40] sm:$0xff]
        %v1584 = vld [vmem:[#allocation10 + $0x48] sm:$0xff]
        %v1585 = vld [vmem:[#allocation10 + $0x50] sm:$0xff]
        %v1586 = vld [vmem:[#allocation10 + $0x58] sm:$0xff]
        %v1587 = vld [vmem:[#allocation10 + $0x60] sm:$0xff]
        %v1588 = vld [vmem:[#allocation10 + $0x68] sm:$0xff]
        %v1589 = vld [vmem:[#allocation10 + $0x70] sm:$0xff]
        %v1590 = vld [vmem:[#allocation10 + $0x78] sm:$0xff]
        %v1591 = vld [vmem:[%s5] sm:$0x1]
        %v1593 = vperm.slane %v1591, 0
        %1595 = vmatpush.msra.mxu0 %v1590
        %1596 = vmatpush.msra.mxu0 %v1589
        %1597 = vmatpush.msra.mxu0 %v1588
        %1598 = vmatpush.msra.mxu0 %v1587
        %1599 = vmatpush.msra.mxu0 %v1586
        %1600 = vmatpush.msra.mxu0 %v1585
        %1601 = vmatpush.msra.mxu0 %v1584
        %1602 = vmatpush.msra.mxu0 %v1583
        %1603 = vmatpush.msra.mxu0 %v1582
        %1604 = vmatpush.msra.mxu0 %v1581
        %1605 = vmatpush.msra.mxu0 %v1580
        %1606 = vmatpush.msra.mxu0 %v1579
        %1607 = vmatpush.msra.mxu0 %v1578
        %1608 = vmatpush.msra.mxu0 %v1577
        %1609 = vmatpush.msra.mxu0 %v1576
        %1610 = vmatpush.msra.mxu0 %v1575
        %1611 = vmatmul.f32.gmra.mxu0 %v1574
        %v1612 = vpop.f32.mrf.mxu0
        %v1613 = vadd.f32 %v1593, %v1612
        %1614 = vdwg.mxu0
        %v1615 = vadd.f32 %v600, %v1613
        %v1616 = vld [vmem:[%s6] sm:$0x1]
        %v1617 = vld [vmem:[%s7] sm:$0x1]
        %1618 = vadd.xlane.f32.xlu0 %v1615
        %v1619 = vpop.xlane.xlu0 %1618
        %v1620 = vrcp.pop 128.0
        %v1621 = vmul.f32 128.0, %v1620
        %v1622 = vsub.f32 1.0, %v1621
        %v1623 = vmul.f32 %v1620, %v1622
        %v1624 = vadd.f32 %v1620, %v1623
        %vm1625 = vweird.f32 %v1620
        %v1626 = vsel %vm1625, %v1620, %v1624
        %v1627 = vmul.f32 %v1619, %v1626
        %v1628 = vsub.f32 %v1615, %v1627
        %v1629 = vmul.f32 %v1628, %v1628
        %1630 = vadd.xlane.f32.xlu0 %v1629
        %v1631 = vpop.xlane.xlu0 %1630
        %v1632 = vmul.f32 %v1631, %v1626
        %v1633 = vadd.f32 %v1632, 1e-05
        %v1634 = vrsqrt.pop %v1633
        %v1635 = vmul.f32 %v1634, %v1633
        %v1636 = vmul.f32 %v1635, %v1634
        %v1637 = vmul.f32 0.5, %v1636
        %v1638 = vsub.f32 1.5, %v1637
        %v1639 = vmul.f32 %v1634, %v1638
        %vm1640 = vweird.f32 %v1633
        %vm1641 = vweird.f32 %v1634
        %vm1642 = vmor %vm1640, %vm1641
        %v1643 = vsel %vm1642, %v1634, %v1639
        %v1644 = vmul.f32 %v1628, %v1643
        %v1646 = vperm.slane %v1616, 0
        %v1648 = vmul.f32 %v1644, %v1646
        %v1650 = vperm.slane %v1617, 0
        %v1652 = vadd.f32 %v1648, %v1650
        %v1653 = vld [vmem:[#allocation11] sm:$0xff]
        %v1654 = vld [vmem:[#allocation11 + $0x8] sm:$0xff]
        %v1655 = vld [vmem:[#allocation11 + $0x10] sm:$0xff]
        %v1656 = vld [vmem:[#allocation11 + $0x18] sm:$0xff]
        %v1657 = vld [vmem:[#allocation11 + $0x20] sm:$0xff]
        %v1658 = vld [vmem:[#allocation11 + $0x28] sm:$0xff]
        %v1659 = vld [vmem:[#allocation11 + $0x30] sm:$0xff]
        %v1660 = vld [vmem:[#allocation11 + $0x38] sm:$0xff]
        %v1661 = vld [vmem:[#allocation11 + $0x40] sm:$0xff]
        %v1662 = vld [vmem:[#allocation11 + $0x48] sm:$0xff]
        %v1663 = vld [vmem:[#allocation11 + $0x50] sm:$0xff]
        %v1664 = vld [vmem:[#allocation11 + $0x58] sm:$0xff]
        %v1665 = vld [vmem:[#allocation11 + $0x60] sm:$0xff]
        %v1666 = vld [vmem:[#allocation11 + $0x68] sm:$0xff]
        %v1667 = vld [vmem:[#allocation11 + $0x70] sm:$0xff]
        %v1668 = vld [vmem:[#allocation11 + $0x78] sm:$0xff]
        %v1669 = vld [vmem:[#allocation11 + $0x80] sm:$0xff]
        %v1670 = vld [vmem:[#allocation11 + $0x88] sm:$0xff]
        %v1671 = vld [vmem:[#allocation11 + $0x90] sm:$0xff]
        %v1672 = vld [vmem:[#allocation11 + $0x98] sm:$0xff]
        %v1673 = vld [vmem:[#allocation11 + $0xa0] sm:$0xff]
        %v1674 = vld [vmem:[#allocation11 + $0xa8] sm:$0xff]
        %v1675 = vld [vmem:[#allocation11 + $0xb0] sm:$0xff]
        %v1676 = vld [vmem:[#allocation11 + $0xb8] sm:$0xff]
        %v1677 = vld [vmem:[#allocation11 + $0xc0] sm:$0xff]
        %v1678 = vld [vmem:[#allocation11 + $0xc8] sm:$0xff]
        %v1679 = vld [vmem:[#allocation11 + $0xd0] sm:$0xff]
        %v1680 = vld [vmem:[#allocation11 + $0xd8] sm:$0xff]
        %v1681 = vld [vmem:[#allocation11 + $0xe0] sm:$0xff]
        %v1682 = vld [vmem:[#allocation11 + $0xe8] sm:$0xff]
        %v1683 = vld [vmem:[#allocation11 + $0xf0] sm:$0xff]
        %v1684 = vld [vmem:[#allocation11 + $0xf8] sm:$0xff]
        %v1685 = vld [vmem:[%s9] sm:$0x3]
        %v1687 = vperm.slane %v1685, 0
        %v1688 = vperm.slane %v1685, 1
        %1691 = vmatpush.msra.mxu0 %v1683
        %1692 = vmatpush.msra.mxu0 %v1681
        %1693 = vmatpush.msra.mxu0 %v1679
        %1694 = vmatpush.msra.mxu0 %v1677
        %1695 = vmatpush.msra.mxu0 %v1675
        %1696 = vmatpush.msra.mxu0 %v1673
        %1697 = vmatpush.msra.mxu0 %v1671
        %1698 = vmatpush.msra.mxu0 %v1669
        %1699 = vmatpush.msra.mxu0 %v1667
        %1700 = vmatpush.msra.mxu0 %v1665
        %1701 = vmatpush.msra.mxu0 %v1663
        %1702 = vmatpush.msra.mxu0 %v1661
        %1703 = vmatpush.msra.mxu0 %v1659
        %1704 = vmatpush.msra.mxu0 %v1657
        %1705 = vmatpush.msra.mxu0 %v1655
        %1706 = vmatpush.msra.mxu0 %v1653
        %1707 = vmatmul.f32.gmra.mxu0 %v1652
        %v1708 = vpop.f32.mrf.mxu0
        %v1709 = vadd.f32 %v1687, %v1708
        %1710 = vdwg.mxu0
        %1711 = vmatpush.msra.mxu0 %v1684
        %1712 = vmatpush.msra.mxu0 %v1682
        %1713 = vmatpush.msra.mxu0 %v1680
        %1714 = vmatpush.msra.mxu0 %v1678
        %1715 = vmatpush.msra.mxu0 %v1676
        %1716 = vmatpush.msra.mxu0 %v1674
        %1717 = vmatpush.msra.mxu0 %v1672
        %1718 = vmatpush.msra.mxu0 %v1670
        %1719 = vmatpush.msra.mxu0 %v1668
        %1720 = vmatpush.msra.mxu0 %v1666
        %1721 = vmatpush.msra.mxu0 %v1664
        %1722 = vmatpush.msra.mxu0 %v1662
        %1723 = vmatpush.msra.mxu0 %v1660
        %1724 = vmatpush.msra.mxu0 %v1658
        %1725 = vmatpush.msra.mxu0 %v1656
        %1726 = vmatpush.msra.mxu0 %v1654
        %1727 = vmatmul.f32.gmra.mxu0 %v1652
        %v1728 = vpop.f32.mrf.mxu0
        %v1729 = vadd.f32 %v1688, %v1728
        %1730 = vdwg.mxu0
        %v1731 = vmul.f32 %v1709, 0.5
        %v1732 = vmul.f32 %v1729, 0.5
        %v1733 = vmul.f32 %v1709, 0.70710677
        %v1734 = vmul.f32 %v1729, 0.70710677
        %v1735 = vmul.f32 %v1733, %v1733
        %v1736 = vmin.f32 16.0, %v1735
        %v1737 = vmul.f32 %v1736, 2.1237322e-06
        %v1738 = vadd.f32 %v1737, 0.00028619796
        %v1739 = vmul.f32 %v1736, %v1738
        %v1740 = vadd.f32 %v1739, 0.0036580483
        %v1741 = vmul.f32 %v1736, %v1740
        %v1742 = vadd.f32 %v1741, 0.05243302
        %v1743 = vmul.f32 %v1736, %v1742
        %v1744 = vadd.f32 %v1743, 0.18741608
        %v1745 = vmul.f32 %v1736, %v1744
        %v1746 = vadd.f32 %v1745, 1.1283791
        %v1747 = vmul.f32 %v1733, %v1746
        %v1748 = vmul.f32 %v1736, 3.8918573e-05
        %v1749 = vadd.f32 %v1748, 0.001143296
        %v1750 = vmul.f32 %v1736, %v1749
        %v1751 = vadd.f32 %v1750, 0.014752088
        %v1752 = vmul.f32 %v1736, %v1751
        %v1753 = vadd.f32 %v1752, 0.112945676
        %v1754 = vmul.f32 %v1736, %v1753
        %v1755 = vadd.f32 %v1754, 0.4994258
        %v1756 = vmul.f32 %v1736, %v1755
        %v1757 = vadd.f32 %v1756, 1.0
        %v1758 = vrcp.pop %v1757
        %v1759 = vmul.f32 %v1757, %v1758
        %v1760 = vsub.f32 1.0, %v1759
        %v1761 = vmul.f32 %v1758, %v1760
        %v1762 = vadd.f32 %v1758, %v1761
        %vm1763 = vweird.f32 %v1757
        %vm1764 = vweird.f32 %v1758
        %vm1765 = vmor %vm1763, %vm1764
        %v1766 = vsel %vm1765, %v1758, %v1762
        %v1767 = vand.u32 2147483647, %v1757
        %vm1768 = vcmp.eq.f32.partialorder %v1767, 8.507059e+37
        %v1769 = vand.u32 %v1757, 2147483648
        %v1770 = vor.u32 1.1754944e-38, %v1769
        %v1771 = vsel %vm1768, %v1770, %v1766
        %v1772 = vmul.f32 %v1747, %v1771
        %v1773 = vmin.f32 %v1772, 1.0
        %v1774 = vmax.f32 %v1773, -1.0
        %v1775 = vmul.f32 %v1734, %v1734
        %v1776 = vmin.f32 16.0, %v1775
        %v1777 = vmul.f32 %v1776, 2.1237322e-06
        %v1778 = vadd.f32 %v1777, 0.00028619796
        %v1779 = vmul.f32 %v1776, %v1778
        %v1780 = vadd.f32 %v1779, 0.0036580483
        %v1781 = vmul.f32 %v1776, %v1780
        %v1782 = vadd.f32 %v1781, 0.05243302
        %v1783 = vmul.f32 %v1776, %v1782
        %v1784 = vadd.f32 %v1783, 0.18741608
        %v1785 = vmul.f32 %v1776, %v1784
        %v1786 = vadd.f32 %v1785, 1.1283791
        %v1787 = vmul.f32 %v1734, %v1786
        %v1788 = vmul.f32 %v1776, 3.8918573e-05
        %v1789 = vadd.f32 %v1788, 0.001143296
        %v1790 = vmul.f32 %v1776, %v1789
        %v1791 = vadd.f32 %v1790, 0.014752088
        %v1792 = vmul.f32 %v1776, %v1791
        %v1793 = vadd.f32 %v1792, 0.112945676
        %v1794 = vmul.f32 %v1776, %v1793
        %v1795 = vadd.f32 %v1794, 0.4994258
        %v1796 = vmul.f32 %v1776, %v1795
        %v1797 = vadd.f32 %v1796, 1.0
        %v1798 = vrcp.pop %v1797
        %v1799 = vmul.f32 %v1797, %v1798
        %v1800 = vsub.f32 1.0, %v1799
        %v1801 = vmul.f32 %v1798, %v1800
        %v1802 = vadd.f32 %v1798, %v1801
        %vm1803 = vweird.f32 %v1797
        %vm1804 = vweird.f32 %v1798
        %vm1805 = vmor %vm1803, %vm1804
        %v1806 = vsel %vm1805, %v1798, %v1802
        %v1807 = vand.u32 2147483647, %v1797
        %vm1808 = vcmp.eq.f32.partialorder %v1807, 8.507059e+37
        %v1809 = vand.u32 %v1797, 2147483648
        %v1810 = vor.u32 1.1754944e-38, %v1809
        %v1811 = vsel %vm1808, %v1810, %v1806
        %v1812 = vmul.f32 %v1787, %v1811
        %v1813 = vmin.f32 %v1812, 1.0
        %v1814 = vmax.f32 %v1813, -1.0
        %v1815 = vadd.f32 %v1774, 1.0
        %v1816 = vadd.f32 %v1814, 1.0
        %v1817 = vmul.f32 %v1731, %v1815
        %v1818 = vmul.f32 %v1732, %v1816
        %v1819 = vld [vmem:[#allocation13] sm:$0xff]
        %v1820 = vld [vmem:[#allocation13 + $0x8] sm:$0xff]
        %v1821 = vld [vmem:[#allocation13 + $0x10] sm:$0xff]
        %v1822 = vld [vmem:[#allocation13 + $0x18] sm:$0xff]
        %v1823 = vld [vmem:[#allocation13 + $0x20] sm:$0xff]
        %v1824 = vld [vmem:[#allocation13 + $0x28] sm:$0xff]
        %v1825 = vld [vmem:[#allocation13 + $0x30] sm:$0xff]
        %v1826 = vld [vmem:[#allocation13 + $0x38] sm:$0xff]
        %v1827 = vld [vmem:[#allocation13 + $0x40] sm:$0xff]
        %v1828 = vld [vmem:[#allocation13 + $0x48] sm:$0xff]
        %v1829 = vld [vmem:[#allocation13 + $0x50] sm:$0xff]
        %v1830 = vld [vmem:[#allocation13 + $0x58] sm:$0xff]
        %v1831 = vld [vmem:[#allocation13 + $0x60] sm:$0xff]
        %v1832 = vld [vmem:[#allocation13 + $0x68] sm:$0xff]
        %v1833 = vld [vmem:[#allocation13 + $0x70] sm:$0xff]
        %v1834 = vld [vmem:[#allocation13 + $0x78] sm:$0xff]
        %v1835 = vld [vmem:[#allocation13 + $0x80] sm:$0xff]
        %v1836 = vld [vmem:[#allocation13 + $0x88] sm:$0xff]
        %v1837 = vld [vmem:[#allocation13 + $0x90] sm:$0xff]
        %v1838 = vld [vmem:[#allocation13 + $0x98] sm:$0xff]
        %v1839 = vld [vmem:[#allocation13 + $0xa0] sm:$0xff]
        %v1840 = vld [vmem:[#allocation13 + $0xa8] sm:$0xff]
        %v1841 = vld [vmem:[#allocation13 + $0xb0] sm:$0xff]
        %v1842 = vld [vmem:[#allocation13 + $0xb8] sm:$0xff]
        %v1843 = vld [vmem:[#allocation13 + $0xc0] sm:$0xff]
        %v1844 = vld [vmem:[#allocation13 + $0xc8] sm:$0xff]
        %v1845 = vld [vmem:[#allocation13 + $0xd0] sm:$0xff]
        %v1846 = vld [vmem:[#allocation13 + $0xd8] sm:$0xff]
        %v1847 = vld [vmem:[#allocation13 + $0xe0] sm:$0xff]
        %v1848 = vld [vmem:[#allocation13 + $0xe8] sm:$0xff]
        %v1849 = vld [vmem:[#allocation13 + $0xf0] sm:$0xff]
        %v1850 = vld [vmem:[#allocation13 + $0xf8] sm:$0xff]
        %v1851 = vld [vmem:[%s11] sm:$0x1]
        %v1853 = vperm.slane %v1851, 0
        %1855 = vmatpush.msra.mxu0 %v1834
        %1856 = vmatpush.msra.mxu0 %v1833
        %1857 = vmatpush.msra.mxu0 %v1832
        %1858 = vmatpush.msra.mxu0 %v1831
        %1859 = vmatpush.msra.mxu0 %v1830
        %1860 = vmatpush.msra.mxu0 %v1829
        %1861 = vmatpush.msra.mxu0 %v1828
        %1862 = vmatpush.msra.mxu0 %v1827
        %1863 = vmatpush.msra.mxu0 %v1826
        %1864 = vmatpush.msra.mxu0 %v1825
        %1865 = vmatpush.msra.mxu0 %v1824
        %1866 = vmatpush.msra.mxu0 %v1823
        %1867 = vmatpush.msra.mxu0 %v1822
        %1868 = vmatpush.msra.mxu0 %v1821
        %1869 = vmatpush.msra.mxu0 %v1820
        %1870 = vmatpush.msra.mxu0 %v1819
        %1871 = vmatmul.f32.gmra.mxu0 %v1817
        %v1872 = vpop.f32.mrf.mxu0
        %v1873 = vadd.f32 %v1853, %v1872
        %1874 = vdwg.mxu0
        %1875 = vmatpush.msra.mxu0 %v1850
        %1876 = vmatpush.msra.mxu0 %v1849
        %1877 = vmatpush.msra.mxu0 %v1848
        %1878 = vmatpush.msra.mxu0 %v1847
        %1879 = vmatpush.msra.mxu0 %v1846
        %1880 = vmatpush.msra.mxu0 %v1845
        %1881 = vmatpush.msra.mxu0 %v1844
        %1882 = vmatpush.msra.mxu0 %v1843
        %1883 = vmatpush.msra.mxu0 %v1842
        %1884 = vmatpush.msra.mxu0 %v1841
        %1885 = vmatpush.msra.mxu0 %v1840
        %1886 = vmatpush.msra.mxu0 %v1839
        %1887 = vmatpush.msra.mxu0 %v1838
        %1888 = vmatpush.msra.mxu0 %v1837
        %1889 = vmatpush.msra.mxu0 %v1836
        %1890 = vmatpush.msra.mxu0 %v1835
        %1891 = vmatmul.f32.gmra.mxu0 %v1818
        %v1892 = vpop.f32.mrf.mxu0
        %v1893 = vadd.f32 %v1873, %v1892
        %1894 = vdwg.mxu0
        %v1895 = vadd.f32 %v1893, %v1652
        %v1896 = vld [vmem:[%s12] sm:$0x1]
        %v1897 = vld [vmem:[%s13] sm:$0x1]
        %1898 = vadd.xlane.f32.xlu0 %v1895
        %v1899 = vpop.xlane.xlu0 %1898
        %v1900 = vmul.f32 %v1899, %v1626
        %v1901 = vsub.f32 %v1895, %v1900
        %v1902 = vmul.f32 %v1901, %v1901
        %1903 = vadd.xlane.f32.xlu0 %v1902
        %v1904 = vpop.xlane.xlu0 %1903
        %v1905 = vmul.f32 %v1904, %v1626
        %v1906 = vadd.f32 %v1905, 1e-05
        %v1907 = vrsqrt.pop %v1906
        %v1908 = vmul.f32 %v1907, %v1906
        %v1909 = vmul.f32 %v1908, %v1907
        %v1910 = vmul.f32 0.5, %v1909
        %v1911 = vsub.f32 1.5, %v1910
        %v1912 = vmul.f32 %v1907, %v1911
        %vm1913 = vweird.f32 %v1906
        %vm1914 = vweird.f32 %v1907
        %vm1915 = vmor %vm1913, %vm1914
        %v1916 = vsel %vm1915, %v1907, %v1912
        %v1917 = vmul.f32 %v1901, %v1916
        %v1919 = vperm.slane %v1896, 0
        %v1921 = vmul.f32 %v1917, %v1919
        %v1923 = vperm.slane %v1897, 0
        %v1925 = vadd.f32 %v1921, %v1923
        %1926 = vst [vmem:[%s599] sm:$0xff] %v1925
        %s1927 = sand.u32 %s348, 1
        %s1928 = scalar_lea.sflag [#allocation4], %s1927
        %s1929 = sand.u32 %s348, 1
        %s1930 = smul.addr %s1929, 8
        %s1931 = scalar_lea.vmem [#allocation14], %s1930
        // Predicated region
        $region105: #{tpu_custom_call.1} parent=75 // pred_check
          %p1932 = pneg %p358
        $region106: #{tpu_custom_call.1} parent=75 // pred_check_branch
          %1934 = sbr.rel (%p1932) target = $region108
        $region107: #{tpu_custom_call.1} parent=75 // pred_region
          %1936 = vsyncadd %s1928, 0
          %s1937 = smul.addr %s36, 8
          %s1938 = scalar_lea.hbm %s14, %s1937
          %s1940 = sshll.u32 %s1931, 4
          %s1941 = int_to_ptr.vmem [resolvable:$true] %s1940
          %s1942 = sshll.u32 %s1938, 4
          %s1943 = int_to_ptr.hbm [resolvable:$true] %s1942
          %1945 = dma.vmem_to_hbm [thread:$0]  %s1941, 128, %s1943, %s1928
        $region108: #{tpu_custom_call.1} parent=75 // pred_fallthru
          _
      $region76: #{tpu_custom_call.1} parent=5 // pred_fallthru
        _
      %p1946 = scmp.le.s32.totalorder 2, %s31
      // Predicated region
      $region109: #{tpu_custom_call.1} parent=5 // pred_check
        %p1947 = pneg %p1946
      $region110: #{tpu_custom_call.1} parent=5 // pred_check_branch
        %1949 = sbr.rel (%p1947) target = $region112
      $region111: #{tpu_custom_call.1} parent=5 // pred_region
        %s1950 = ssub.s32 %s31, 2
        // Predicated region
        $region113: #{tpu_custom_call.1} parent=111 // pred_check
          %p1951 = pneg %p364
        $region114: #{tpu_custom_call.1} parent=111 // pred_check_branch
          %1953 = sbr.rel (%p1951) target = $region116
        $region115: #{tpu_custom_call.1} parent=111 // pred_region
          %s1954 = sand.u32 %s349, 1
          %s1955 = scalar_lea.sflag [#allocation4], %s1954
          %s1956 = sand.u32 %s349, 1
          %s1957 = smul.addr %s1956, 8
          %s1958 = scalar_lea.vmem [#allocation14], %s1957
          %1960 = dma.done %s1955, 128
        $region116: #{tpu_custom_call.1} parent=111 // pred_fallthru
          _
      $region112: #{tpu_custom_call.1} parent=5 // pred_fallthru
        _
    $region6: #{tpu_custom_call.1} parent=1 // loop_footer
      %s35 = sadd.s32 1, %s31
    $region7: #{tpu_custom_call.1} parent=1 // loop_footer_branch
      %30 = sbr.rel target = $region3
    $region8: #{tpu_custom_call.1} parent=1 // loop_exit
      _
    %1961 = vsyncpa [#allocation3], 1
    %s1962 = scalar_lea.sflag [#allocation3], 1
    %1963 = vsyncpa %s1962, 1
    %1964 = vsyncpa [#allocation6], 1
    %s1965 = scalar_lea.sflag [#allocation6], 1
    %1966 = vsyncpa %s1965, 1
    %1967 = vsyncpa [#allocation9], 1
    %1968 = vsyncpa [#allocation12], 1
    %1969 = vsyncpa [#allocation4], 1
    %s1970 = scalar_lea.sflag [#allocation4], 1
    %1971 = vsyncpa %s1970, 1

</llo_original>
